<compile_context>
chip_gen: v7x
topology: tpu7x:2x2x1
jax: 0.10.0
libtpu: 0.0.40
codegen_flags: <defaults>
</compile_context>

<pallas_src>
from functools import partial

import numpy as np
import jax
import jax.numpy as jnp
from jax import lax
from jax.experimental import pallas as pl
from jax.experimental.pallas import tpu as pltpu

KS = 7          # spatial-attention conv kernel size
PAD = KS // 2   # = 3 (zero padding, matches nn.Conv2d(2, 1, 7, padding=3))
_HI = lax.Precision.HIGHEST


def mipam_kernel(x_ref, w1t_ref, w2t_ref, m_ref, out_ref, *, C, HW, flat):
    """One grid step = bt batch elements.

    Non-flat path: x_ref/out_ref blocks are (bt, C, HW) with HW a lane-dense multiple of 128.
    Flat path (HW % 128 != 0): blocks are (bt, 1, C*HW) so HBM/VMEM stores stay lane-dense; the
    (bt, C, HW) view needed for pooling is materialized once in VMEM.
    """
    xin = x_ref[...].astype(jnp.float32)          # upcast so bf16 inputs pool in f32
    bt = xin.shape[0]
    x = xin.reshape(bt, C, HW) if flat else xin   # (bt, C, HW)

    # ---------- ChannelAttention1: one fused SE-MLP pass over stacked avg/max rows ----------
    pooled = jnp.concatenate([jnp.mean(x, axis=2), jnp.max(x, axis=2)], axis=0)   # (2*bt, C)
    h = jnp.maximum(
        jnp.dot(pooled, w1t_ref[...], precision=_HI, preferred_element_type=jnp.float32), 0.0)
    a = jnp.dot(h, w2t_ref[...], precision=_HI, preferred_element_type=jnp.float32)  # (2*bt, C)
    attn_c = jax.nn.sigmoid(a[:bt] + a[bt:])                                      # (bt, C)
    x1 = x * attn_c[:, :, None]                                                   # (bt, C, HW)

    # ---------- SpatialAttention1: 7x7 conv folded into ONE (2*HW x HW) bf16 matmul ----------
    s2 = jnp.concatenate([jnp.mean(x1, axis=1), jnp.max(x1, axis=1)], axis=-1)    # (bt, 2*HW)
    conv = jnp.dot(s2.astype(jnp.bfloat16), m_ref[...],
                   preferred_element_type=jnp.float32)                            # (bt, HW)
    attn_s = jax.nn.sigmoid(conv)

    gated = x1 * attn_s[:, None, :]                                               # (bt, C, HW)
    if flat:
        gated = gated.reshape(bt, 1, C * HW)
    out_ref[...] = gated.astype(out_ref.dtype)


def _spatial_conv_matrix(sa_w, H, W):
    """Fold the zero-padded 7x7 conv (2 in-ch -> 1 out-ch) into a single (2*HW, HW) matrix M so
       conv_flat = concat([avg_flat, max_flat], -1) @ M.  Stored bf16 (MXU-native operand)."""
    qi = jnp.arange(H).reshape(H, 1, 1, 1)           # input row
    qj = jnp.arange(W).reshape(1, W, 1, 1)           # input col
    oi = jnp.arange(H).reshape(1, 1, H, 1)           # output row
    oj = jnp.arange(W).reshape(1, 1, 1, W)           # output col
    di = qi - oi + PAD
    dj = qj - oj + PAD
    valid = (di >= 0) & (di < KS) & (dj >= 0) & (dj < KS)
    w = sa_w.reshape(2, KS, KS)
    taps = w[:, jnp.clip(di, 0, KS - 1), jnp.clip(dj, 0, KS - 1)]     # (2, H, W, H, W)
    m = jnp.where(valid[None], taps, 0.0).reshape(2 * H * W, H * W)   # rows: [avg taps; max taps]
    return m.astype(jnp.bfloat16)


def _vmem_budget_bytes():
    """Generation-aware VMEM budget (v5e/v6e report 128 MiB physical, v7x 64 MiB per TC)."""
    try:
        cap = getattr(pltpu.get_tpu_info(), "vmem_capacity_bytes", None)
    except Exception:
        cap = None
    if not cap:
        cap = 64 << 20                     # conservative lower bound (v7x per-core physical)
    return int(cap * 0.7)                  # leave headroom for compiler scratch / semaphores


def _pick_bt(B, C, HW, invariant_bytes, budget_bytes):
    """Largest divisor of B whose double-buffered in+out blocks fit the remaining budget,
       capped at B//2 so the grid has >= 2 steps and both v7x TensorCores get work."""
    per = C * HW * 4                                  # f32 bytes per batch element
    avail = budget_bytes - invariant_bytes
    max_bt = max(1, int(avail // (4 * per)))          # in + out, each double-buffered
    if B > 1:
        max_bt = min(max_bt, B // 2)                  # >= 2 grid steps for the v7x megacore
    bt = 1
    for d in range(1, B + 1):
        if B % d == 0 and d <= max_bt:
            bt = d
    return bt


def mipam_forward(x, fc1_w, fc2_w, sa_w, *, bt=None):
    """x: (B,C,H,W). fc1_w: (Cr,C,1,1). fc2_w: (C,Cr,1,1). sa_w: (1,2,7,7)."""
    B, C, H, W = x.shape
    Cr = fc1_w.shape[0]
    HW = H * W

    # Glue: lane-dense views / weight reorientation so the kernel needs no transposes.
    w1t = jnp.transpose(fc1_w.reshape(Cr, C)).astype(jnp.float32)   # (C, Cr)
    w2t = jnp.transpose(fc2_w.reshape(C, Cr)).astype(jnp.float32)   # (Cr, C)
    m = _spatial_conv_matrix(sa_w, H, W)                            # (2*HW, HW) bf16

    # Lane-dense layout choice (review: masked vst on HW < 128 was the biggest store-path cost).
    flat = (HW % 128) != 0
    if flat:
        x_in = x.reshape(B, 1, C * HW)
        blk = (None, 1, C * HW)   # placeholder; bt filled below
        out_struct_shape = (B, 1, C * HW)
    else:
        x_in = x.reshape(B, C, HW)
        blk = (None, C, HW)
        out_struct_shape = (B, C, HW)

    vmem_limit = _vmem_budget_bytes()
    invariant_bytes = 2 * (m.size * m.dtype.itemsize + w1t.size * 4 + w2t.size * 4)  # double-buffered
    if bt is None:
        bt = _pick_bt(B, C, HW, invariant_bytes, vmem_limit - (2 << 20))
    assert B % bt == 0
    blk = (bt,) + blk[1:]

    out = pl.pallas_call(
        partial(mipam_kernel, C=C, HW=HW, flat=flat),
        out_shape=jax.ShapeDtypeStruct(out_struct_shape, x.dtype),
        grid=(B // bt,),
        in_specs=[
            pl.BlockSpec(blk, lambda b: (b, 0, 0)),
            # Invariant operands (constant index maps). NOTE: the pipeline still double-buffers
            # them; their 2x footprint is accounted for in the bt budget above.
            # TODO(synk): for large HW, hoist M via a one-shot DMA / pl.Buffered(1) to save VMEM.
            pl.BlockSpec((C, Cr), lambda b: (0, 0)),
            pl.BlockSpec((Cr, C), lambda b: (0, 0)),
            pl.BlockSpec((2 * HW, HW), lambda b: (0, 0)),
        ],
        out_specs=pl.BlockSpec(blk, lambda b: (b, 0, 0)),
        compiler_params=pltpu.CompilerParams(
            dimension_semantics=("parallel",),          # batch steps independent (2 TCs on v7x)
            vmem_limit_bytes=vmem_limit),
    )(x_in, w1t, w2t, m)
    return out.reshape(B, C, H, W)


def mipam_reference(x, fc1_w, fc2_w, sa_w):
    """Pure-JAX f32 reference matching the PyTorch forward return value."""
    B, C, H, W = x.shape
    Cr = fc1_w.shape[0]
    w1 = fc1_w.reshape(Cr, C)
    w2 = fc2_w.reshape(C, Cr)
    avg = x.mean(axis=(2, 3))
    mx = x.max(axis=(2, 3))

    def se(v):
        h = jax.nn.relu(jnp.dot(v, w1.T, precision=_HI))
        return jnp.dot(h, w2.T, precision=_HI)

    attn_c = jax.nn.sigmoid(se(avg) + se(mx))
    x1 = x * attn_c[:, :, None, None]
    avg_s = x1.mean(axis=1, keepdims=True)
    max_s = x1.max(axis=1, keepdims=True)
    inp = jnp.concatenate([avg_s, max_s], axis=1)
    conv = lax.conv_general_dilated(
        inp, sa_w, window_strides=(1, 1), padding=[(PAD, PAD), (PAD, PAD)],
        dimension_numbers=("NCHW", "OIHW", "NCHW"), precision=_HI)
    return x1 * jax.nn.sigmoid(conv)


if __name__ == "__main__":
    # MIPAM(in_channel=16, in_spatial=256, cha_ratio=8) -> fc hidden = 2; spatial 16x16 (HW=256,
    # a multiple of 128 so all loads/stores are lane-dense); batch = 2 -> grid of 2 parallel steps.
    B, C, H, W = 2, 16, 16, 16
    cha_ratio = 8
    Cr = C // cha_ratio

    key = jax.random.PRNGKey(0)
    k1, k2, k3, k4 = jax.random.split(key, 4)
    x = jax.random.normal(k1, (B, C, H, W), jnp.float32)
    fc1_w = jax.random.normal(k2, (Cr, C, 1, 1), jnp.float32) * 0.2   # ChannelAttention1.fc1 (bias=False)
    fc2_w = jax.random.normal(k3, (C, Cr, 1, 1), jnp.float32) * 0.2   # ChannelAttention1.fc2 (bias=False)
    sa_w = jax.random.normal(k4, (1, 2, KS, KS), jnp.float32) * 0.2   # SpatialAttention1.conv1 (bias=False)

    out = jax.block_until_ready(mipam_forward(x, fc1_w, fc2_w, sa_w))
    ref = jax.block_until_ready(mipam_reference(x, fc1_w, fc2_w, sa_w))

    assert out.shape == (B, C, H, W)
    # Tolerance reflects the bf16 operands on the folded spatial-conv matmul (f32 accumulate);
    # typical error is ~1e-3, structural bugs would be O(0.1-1).
    assert np.allclose(np.asarray(out), np.asarray(ref), atol=1e-2, rtol=1e-2)
    print("KERNEL_OK")
</pallas_src>

<mosaic_0001>
module attributes {stable_mosaic.version = 11 : i64} {
  func.func @mipam_kernel(%arg0: i32, %arg1: memref<1x16x256xf32, #tpu.memory_space<vmem>>, %arg2: memref<16x2xf32, #tpu.memory_space<vmem>>, %arg3: memref<2x16xf32, #tpu.memory_space<vmem>>, %arg4: memref<512x256xbf16, #tpu.memory_space<vmem>>, %arg5: memref<1x16x256xf32, #tpu.memory_space<vmem>>) attributes {dimension_semantics = [#tpu.dimension_semantics<parallel>], iteration_bounds = array<i64: 2>, scalar_prefetch = 0 : i64, scratch_operands = 0 : i64, tpu.core_type = #tpu.core_type<tc>, window_params = [{transform_indices = @transform_0, window_bounds = array<i64: 1, 16, 256>}, {pipeline_mode = #tpu.pipeline_mode<synchronous>, transform_indices = @transform_1, window_bounds = array<i64: 16, 2>}, {pipeline_mode = #tpu.pipeline_mode<synchronous>, transform_indices = @transform_2, window_bounds = array<i64: 2, 16>}, {pipeline_mode = #tpu.pipeline_mode<synchronous>, transform_indices = @transform_3, window_bounds = array<i64: 512, 256>}, {transform_indices = @transform_4, window_bounds = array<i64: 1, 16, 256>}]} {
    %c0 = arith.constant 0 : index
    %c0_0 = arith.constant 0 : index
    %c0_1 = arith.constant 0 : index
    %0 = vector.load %arg1[%c0, %c0_0, %c0_1] : memref<1x16x256xf32, #tpu.memory_space<vmem>>, vector<1x16x256xf32>
    %cst = arith.constant dense<0.000000e+00> : vector<1x16xf32>
    %1 = vector.multi_reduction <add>, %0, %cst [2] : vector<1x16x256xf32> to vector<1x16xf32>
    %cst_2 = arith.constant 2.560000e+02 : f32
    %2 = vector.broadcast %cst_2 : f32 to vector<1x16xf32>
    %3 = arith.divf %1, %2 : vector<1x16xf32>
    %cst_3 = arith.constant dense<0xFF800000> : vector<1x16xf32>
    %4 = vector.multi_reduction <maximumf>, %0, %cst_3 [2] : vector<1x16x256xf32> to vector<1x16xf32>
    %5 = tpu.concatenate %3, %4 in 0 : vector<1x16xf32>, vector<1x16xf32> -> vector<2x16xf32>
    %c0_4 = arith.constant 0 : index
    %c0_5 = arith.constant 0 : index
    %6 = vector.load %arg2[%c0_4, %c0_5] : memref<16x2xf32, #tpu.memory_space<vmem>>, vector<16x2xf32>
    %cst_6 = arith.constant dense<0.000000e+00> : vector<2x2xf32>
    %7 = tpu.matmul %5, %6, %cst_6 {dimension_numbers = #tpu.dot_dimension_numbers<[1], [0], [0], [1], [0, 0, 1, 1], [], []>, precision = #tpu.contract_precision<fp32>} : vector<2x16xf32>, vector<16x2xf32>, vector<2x2xf32> -> vector<2x2xf32>
    %cst_7 = arith.constant 0.000000e+00 : f32
    %8 = vector.broadcast %cst_7 : f32 to vector<2x2xf32>
    %9 = arith.maximumf %7, %8 : vector<2x2xf32>
    %c0_8 = arith.constant 0 : index
    %c0_9 = arith.constant 0 : index
    %10 = vector.load %arg3[%c0_8, %c0_9] : memref<2x16xf32, #tpu.memory_space<vmem>>, vector<2x16xf32>
    %cst_10 = arith.constant dense<0.000000e+00> : vector<2x16xf32>
    %11 = tpu.matmul %9, %10, %cst_10 {dimension_numbers = #tpu.dot_dimension_numbers<[1], [0], [0], [1], [0, 0, 1, 1], [], []>, precision = #tpu.contract_precision<fp32>} : vector<2x2xf32>, vector<2x16xf32>, vector<2x16xf32> -> vector<2x16xf32>
    %12 = vector.extract_strided_slice %11 {offsets = [0, 0], sizes = [1, 16], strides = [1, 1]} : vector<2x16xf32> to vector<1x16xf32>
    %13 = vector.extract_strided_slice %11 {offsets = [1, 0], sizes = [1, 16], strides = [1, 1]} : vector<2x16xf32> to vector<1x16xf32>
    %14 = arith.addf %12, %13 : vector<1x16xf32>
    %15 = arith.negf %14 : vector<1x16xf32>
    %16 = math.exp %15 : vector<1x16xf32>
    %cst_11 = arith.constant 1.000000e+00 : f32
    %17 = vector.broadcast %cst_11 : f32 to vector<1x16xf32>
    %18 = arith.addf %17, %16 : vector<1x16xf32>
    %19 = arith.divf %17, %18 : vector<1x16xf32>
    %20 = vector.shape_cast %19 : vector<1x16xf32> to vector<1x16x1xf32>
    %21 = vector.broadcast %20 : vector<1x16x1xf32> to vector<1x16x256xf32>
    %22 = arith.mulf %0, %21 : vector<1x16x256xf32>
    %cst_12 = arith.constant dense<0.000000e+00> : vector<1x256xf32>
    %23 = vector.multi_reduction <add>, %22, %cst_12 [1] : vector<1x16x256xf32> to vector<1x256xf32>
    %cst_13 = arith.constant 1.600000e+01 : f32
    %24 = vector.broadcast %cst_13 : f32 to vector<1x256xf32>
    %25 = arith.divf %23, %24 : vector<1x256xf32>
    %cst_14 = arith.constant dense<0xFF800000> : vector<1x256xf32>
    %26 = vector.multi_reduction <maximumf>, %22, %cst_14 [1] : vector<1x16x256xf32> to vector<1x256xf32>
    %27 = tpu.concatenate %25, %26 in 1 : vector<1x256xf32>, vector<1x256xf32> -> vector<1x512xf32>
    %28 = arith.truncf %27 : vector<1x512xf32> to vector<1x512xbf16>
    %c0_15 = arith.constant 0 : index
    %c0_16 = arith.constant 0 : index
    %29 = vector.load %arg4[%c0_15, %c0_16] : memref<512x256xbf16, #tpu.memory_space<vmem>>, vector<512x256xbf16>
    %cst_17 = arith.constant dense<0.000000e+00> : vector<1x256xf32>
    %30 = tpu.matmul %28, %29, %cst_17 {dimension_numbers = #tpu.dot_dimension_numbers<[1], [0], [0], [1], [0, 0, 1, 1], [], []>} : vector<1x512xbf16>, vector<512x256xbf16>, vector<1x256xf32> -> vector<1x256xf32>
    %31 = arith.negf %30 : vector<1x256xf32>
    %32 = math.exp %31 : vector<1x256xf32>
    %cst_18 = arith.constant 1.000000e+00 : f32
    %33 = vector.broadcast %cst_18 : f32 to vector<1x256xf32>
    %34 = arith.addf %33, %32 : vector<1x256xf32>
    %35 = arith.divf %33, %34 : vector<1x256xf32>
    %36 = vector.shape_cast %35 : vector<1x256xf32> to vector<1x1x256xf32>
    %37 = vector.broadcast %36 : vector<1x1x256xf32> to vector<1x16x256xf32>
    %38 = arith.mulf %22, %37 : vector<1x16x256xf32>
    %c0_19 = arith.constant 0 : index
    %c0_20 = arith.constant 0 : index
    %c0_21 = arith.constant 0 : index
    %39 = vector.load %arg5[%c0_19, %c0_20, %c0_21] : memref<1x16x256xf32, #tpu.memory_space<vmem>>, vector<1x16x256xf32>
    tpu.vector_store %arg5[%c0_19, %c0_20, %c0_21], %38 {strides = array<i32>} : memref<1x16x256xf32, #tpu.memory_space<vmem>>, vector<1x16x256xf32>,
    return
  }
  func.func @transform_0(%arg0: i32) -> (i32, i32, i32) {
    %c0_i32 = arith.constant 0 : i32
    %c0_i32_0 = arith.constant 0 : i32
    %c0_i32_1 = arith.constant 0 : i32
    return %arg0, %c0_i32, %c0_i32_0 : i32, i32, i32
  }
  func.func @transform_1(%arg0: i32) -> (i32, i32) {
    %c0_i32 = arith.constant 0 : i32
    %c0_i32_0 = arith.constant 0 : i32
    %c0_i32_1 = arith.constant 0 : i32
    return %c0_i32, %c0_i32_0 : i32, i32
  }
  func.func @transform_2(%arg0: i32) -> (i32, i32) {
    %c0_i32 = arith.constant 0 : i32
    %c0_i32_0 = arith.constant 0 : i32
    %c0_i32_1 = arith.constant 0 : i32
    return %c0_i32, %c0_i32_0 : i32, i32
  }
  func.func @transform_3(%arg0: i32) -> (i32, i32) {
    %c0_i32 = arith.constant 0 : i32
    %c0_i32_0 = arith.constant 0 : i32
    %c0_i32_1 = arith.constant 0 : i32
    return %c0_i32, %c0_i32_0 : i32, i32
  }
  func.func @transform_4(%arg0: i32) -> (i32, i32, i32) {
    %c0_i32 = arith.constant 0 : i32
    %c0_i32_0 = arith.constant 0 : i32
    %c0_i32_1 = arith.constant 0 : i32
    return %arg0, %c0_i32, %c0_i32_0 : i32, i32, i32
  }
}

</mosaic_0001>

<llo_original>
// kernel: tpu_custom_call.1
$region0: #{tpu_custom_call.1}
  #allocation0 [shape = 'u32[]', space=smem, size = 0x4, offset = 0x4, fixed_abs, tag = 'smem constant byte address 0x4 - core index']
  #allocation1 [shape = 'u32[144,128]{1,0:T(1,128)}', space=vmem, size = 0x12000, scoped, tag = 'internal scratch']
  %s0 = inlined_call_operand.hbm [shape: f32[2,16,256], index: 0, kind: input, shape index: {}]
  %s1 = inlined_call_operand.vmem [shape: f32[16,2], index: 1, kind: input, shape index: {}]
  %s2 = inlined_call_operand.vmem [shape: f32[2,16], index: 2, kind: input, shape index: {}]
  %s3 = inlined_call_operand.hbm [shape: bf16[512,256], index: 3, kind: input, shape index: {}]
  %s4 = inlined_call_operand.hbm [shape: f32[2,16,256], index: 4, kind: output, shape index: {}]
  %s5 = sld [smem:[#allocation0]]
  $region57: #{tpu_custom_call.1} parent=0
    _
  %s7 = ssub.s32 1, %s5
  %s8 = scalar_select 0, %s7, %s5
  $region1: #{tpu_custom_call.1} parent=0
    #allocation2 [shape = 'u8[32768]{0}', space=vmem, size = 0x8000, scoped, tag = 'input window, operand 0']
    #allocation3 [shape = 's32[2]{0}', space=sflag, size = 0x8, scoped, tag = 'scoped memory for tpu_custom_call.1']
    #allocation4 [shape = 's32[2]{0}', space=sflag, size = 0x8, scoped, tag = 'scoped memory for tpu_custom_call.1']
    #allocation5 [shape = 'u8[262144]{0}', space=vmem, size = 0x40000, scoped, tag = 'input window, operand 3, single buffered']
    #allocation6 [shape = 's32[1]{0}', space=sflag, size = 0x4, scoped, tag = 'scoped memory for tpu_custom_call.1']
    #allocation7 [shape = 'u8[32768]{0}', space=vmem, size = 0x8000, scoped, tag = 'output window, operand 0']
    %9 = vsyncpa [#allocation3], 0
    %s10 = scalar_lea.sflag [#allocation3], 1
    %11 = vsyncpa %s10, 0
    %12 = vsyncpa [#allocation6], 0
    %13 = vsyncpa [#allocation4], 0
    %s14 = scalar_lea.sflag [#allocation4], 1
    %15 = vsyncpa %s14, 0
    loop: start=0, step=1, limit=4
    $region2: #{tpu_custom_call.1} parent=1 // loop_pre_header
      _
    $region3: #{tpu_custom_call.1} parent=1 // loop_header
      %s17 = sphi 0, %s21
      %p18 = scmp.ge.s32.totalorder %s17, 4
      %s27 = sphi 0, %s29
      %s30 = sphi 0, %s27
      %s31 = sphi 0, %s30
      %s47 = sphi 0, %s31
      %s51 = sphi 0, %s51
      %s53 = sphi 0, %s51
      %s54 = sphi 0, %s53
      %s68 = sphi 0, %s54
      %s72 = sphi 0, %s72
      %s74 = sphi 0, %s72
      %s75 = sphi 0, %s74
      %s89 = sphi 0, %s75
      %s93 = sphi 0, %s93
      %s95 = sphi 0, %s93
      %s96 = sphi 0, %s95
      %s110 = sphi 0, %s96
      %s116 = sphi 0, %s118
      %s119 = sphi 0, %s116
      %s120 = sphi 0, %s119
      %s136 = sphi 0, %s120
    $region4: #{tpu_custom_call.1} parent=1 // loop_header_branch
      %20 = sbr.rel (%p18) target = $region8
    $region5: #{tpu_custom_call.1} parent=1 // loop_body
      %s22 = ssub.s32 %s17, 1
      %s23 = ssub.s32 %s17, 2
      %s24 = sadd.s32 %s17, 1
      %s25 = ssub.s32 %s17, %s24
      %p26 = scmp.eq.s32.totalorder %s25, 0
      %s28 = sadd.s32 %s27, 1
      %s29 = scalar_select %p26, %s27, %s28
      %p32 = pneg %p26
      %p33 = scmp.eq.s32.totalorder %s17, 1
      %p34 = por %p32, %p33
      %p35 = scmp.ne.s32.totalorder %s27, %s30
      %p36 = scmp.eq.s32.totalorder %s17, 0
      %p37 = por %p35, %p36
      %p38 = scmp.ne.s32.totalorder %s27, %s30
      %p39 = scmp.eq.s32.totalorder %s22, 1
      %p40 = por %p38, %p39
      %p41 = scmp.ne.s32.totalorder %s30, %s31
      %p42 = scmp.eq.s32.totalorder %s22, 0
      %p43 = por %p41, %p42
      %p44 = scmp.ne.s32.totalorder %s30, %s31
      %p45 = scmp.eq.s32.totalorder %s23, 1
      %p46 = por %p44, %p45
      %p48 = scmp.ne.s32.totalorder %s31, %s47
      %p49 = scmp.eq.s32.totalorder %s23, 0
      %p50 = por %p48, %p49
      %s52 = sadd.s32 %s51, 1
      %p55 = scmp.eq.s32.totalorder %s17, 1
      %p56 = scmp.ne.s32.totalorder %s51, %s53
      %p57 = scmp.eq.s32.totalorder %s17, 0
      %p58 = por %p56, %p57
      %p59 = scmp.ne.s32.totalorder %s51, %s53
      %p60 = scmp.eq.s32.totalorder %s22, 1
      %p61 = por %p59, %p60
      %p62 = scmp.ne.s32.totalorder %s53, %s54
      %p63 = scmp.eq.s32.totalorder %s22, 0
      %p64 = por %p62, %p63
      %p65 = scmp.ne.s32.totalorder %s53, %s54
      %p66 = scmp.eq.s32.totalorder %s23, 1
      %p67 = por %p65, %p66
      %p69 = scmp.ne.s32.totalorder %s54, %s68
      %p70 = scmp.eq.s32.totalorder %s23, 0
      %p71 = por %p69, %p70
      %s73 = sadd.s32 %s72, 1
      %p76 = scmp.eq.s32.totalorder %s17, 1
      %p77 = scmp.ne.s32.totalorder %s72, %s74
      %p78 = scmp.eq.s32.totalorder %s17, 0
      %p79 = por %p77, %p78
      %p80 = scmp.ne.s32.totalorder %s72, %s74
      %p81 = scmp.eq.s32.totalorder %s22, 1
      %p82 = por %p80, %p81
      %p83 = scmp.ne.s32.totalorder %s74, %s75
      %p84 = scmp.eq.s32.totalorder %s22, 0
      %p85 = por %p83, %p84
      %p86 = scmp.ne.s32.totalorder %s74, %s75
      %p87 = scmp.eq.s32.totalorder %s23, 1
      %p88 = por %p86, %p87
      %p90 = scmp.ne.s32.totalorder %s75, %s89
      %p91 = scmp.eq.s32.totalorder %s23, 0
      %p92 = por %p90, %p91
      %s94 = sadd.s32 %s93, 1
      %p97 = scmp.eq.s32.totalorder %s17, 1
      %p98 = scmp.ne.s32.totalorder %s93, %s95
      %p99 = scmp.eq.s32.totalorder %s17, 0
      %p100 = por %p98, %p99
      %p101 = scmp.ne.s32.totalorder %s93, %s95
      %p102 = scmp.eq.s32.totalorder %s22, 1
      %p103 = por %p101, %p102
      %p104 = scmp.ne.s32.totalorder %s95, %s96
      %p105 = scmp.eq.s32.totalorder %s22, 0
      %p106 = por %p104, %p105
      %p107 = scmp.ne.s32.totalorder %s95, %s96
      %p108 = scmp.eq.s32.totalorder %s23, 1
      %p109 = por %p107, %p108
      %p111 = scmp.ne.s32.totalorder %s96, %s110
      %p112 = scmp.eq.s32.totalorder %s23, 0
      %p113 = por %p111, %p112
      %s114 = ssub.s32 %s17, %s24
      %p115 = scmp.eq.s32.totalorder %s114, 0
      %s117 = sadd.s32 %s116, 1
      %s118 = scalar_select %p115, %s116, %s117
      %p121 = pneg %p115
      %p122 = scmp.eq.s32.totalorder %s17, 1
      %p123 = por %p121, %p122
      %p124 = scmp.ne.s32.totalorder %s116, %s119
      %p125 = scmp.eq.s32.totalorder %s17, 0
      %p126 = por %p124, %p125
      %p127 = scmp.ne.s32.totalorder %s116, %s119
      %p128 = scmp.eq.s32.totalorder %s22, 1
      %p129 = por %p127, %p128
      %p130 = scmp.ne.s32.totalorder %s119, %s120
      %p131 = scmp.eq.s32.totalorder %s22, 0
      %p132 = por %p130, %p131
      %p133 = scmp.ne.s32.totalorder %s119, %s120
      %p134 = scmp.eq.s32.totalorder %s23, 1
      %p135 = por %p133, %p134
      %p137 = scmp.ne.s32.totalorder %s120, %s136
      %p138 = scmp.eq.s32.totalorder %s23, 0
      %p139 = por %p137, %p138
      %p140 = scmp.le.s32.totalorder 1, %s17
      %p141 = scmp.lt.s32.totalorder %s17, 3
      %p142 = pnand %p140, %p141
      %p143 = pneg %p142
      // Predicated region
      $region9: #{tpu_custom_call.1} parent=5 // pred_check
        _
      $region10: #{tpu_custom_call.1} parent=5 // pred_check_branch
        %145 = sbr.rel (%p142) target = $region12
      $region11: #{tpu_custom_call.1} parent=5 // pred_region
        %s146 = ssub.s32 %s17, 1
        // Predicated region
        $region13: #{tpu_custom_call.1} parent=11 // pred_check
          %p147 = pneg %p64
        $region14: #{tpu_custom_call.1} parent=11 // pred_check_branch
          %149 = sbr.rel (%p147) target = $region16
        $region15: #{tpu_custom_call.1} parent=11 // pred_region
          _
        $region16: #{tpu_custom_call.1} parent=11 // pred_fallthru
          _
        // Predicated region
        $region17: #{tpu_custom_call.1} parent=11 // pred_check
          %p150 = pneg %p85
        $region18: #{tpu_custom_call.1} parent=11 // pred_check_branch
          %152 = sbr.rel (%p150) target = $region20
        $region19: #{tpu_custom_call.1} parent=11 // pred_region
          _
        $region20: #{tpu_custom_call.1} parent=11 // pred_fallthru
          _
        // Predicated region
        $region21: #{tpu_custom_call.1} parent=11 // pred_check
          %p153 = pneg %p106
        $region22: #{tpu_custom_call.1} parent=11 // pred_check_branch
          %155 = sbr.rel (%p153) target = $region24
        $region23: #{tpu_custom_call.1} parent=11 // pred_region
          %s157 = ssub.s32 8192, 8192
          %158 = vsyncadd [#allocation6], %s157
          %s159 = sshll.u32 [#allocation5], 4
          %s160 = int_to_ptr.vmem [resolvable:$true] %s159
          %165 = dma.hbm_to_vmem [thread:$0]  %s3, 8192, %s160, [#allocation6], 128, 128, 8
        $region24: #{tpu_custom_call.1} parent=11 // pred_fallthru
          _
      $region12: #{tpu_custom_call.1} parent=5 // pred_fallthru
        _
      %p166 = scmp.lt.s32.totalorder %s17, 2
      // Predicated region
      $region25: #{tpu_custom_call.1} parent=5 // pred_check
        %p167 = pneg %p166
      $region26: #{tpu_custom_call.1} parent=5 // pred_check_branch
        %169 = sbr.rel (%p167) target = $region28
      $region27: #{tpu_custom_call.1} parent=5 // pred_region
        // Predicated region
        $region29: #{tpu_custom_call.1} parent=27 // pred_check
          %p170 = pneg %p37
        $region30: #{tpu_custom_call.1} parent=27 // pred_check_branch
          %172 = sbr.rel (%p170) target = $region32
        $region31: #{tpu_custom_call.1} parent=27 // pred_region
          %s173 = sand.u32 %s27, 1
          %s174 = scalar_lea.sflag [#allocation3], %s173
          %s175 = sand.u32 %s27, 1
          %s176 = smul.addr %s175, 32
          %s177 = scalar_lea.vmem [#allocation2], %s176
          %s179 = ssub.s32 512, 512
          %180 = vsyncadd %s174, %s179
          %s181 = smul.addr %s17, 4
          %s182 = smul.addr %s181, 128
          %s183 = scalar_lea.hbm %s0, %s182
          %s184 = sshll.u32 %s177, 4
          %s185 = int_to_ptr.vmem [resolvable:$true] %s184
          %190 = dma.hbm_to_vmem [thread:$0]  %s183, 512, %s185, %s174, 256, 256, 16
        $region32: #{tpu_custom_call.1} parent=27 // pred_fallthru
          _
      $region28: #{tpu_custom_call.1} parent=5 // pred_fallthru
        _
      %p191 = scmp.le.s32.totalorder 1, %s17
      %p192 = scmp.lt.s32.totalorder %s17, 3
      %p193 = pnand %p191, %p192
      %p194 = pneg %p193
      // Predicated region
      $region33: #{tpu_custom_call.1} parent=5 // pred_check
        _
      $region34: #{tpu_custom_call.1} parent=5 // pred_check_branch
        %196 = sbr.rel (%p193) target = $region36
      $region35: #{tpu_custom_call.1} parent=5 // pred_region
        %s197 = ssub.s32 %s17, 1
        %s198 = sand.u32 %s30, 1
        %s199 = scalar_lea.sflag [#allocation3], %s198
        %s200 = sand.u32 %s30, 1
        %s201 = smul.addr %s200, 32
        %s202 = scalar_lea.vmem [#allocation2], %s201
        // Predicated region
        $region37: #{tpu_custom_call.1} parent=35 // pred_check
          %p203 = pneg %p43
        $region38: #{tpu_custom_call.1} parent=35 // pred_check_branch
          %205 = sbr.rel (%p203) target = $region40
        $region39: #{tpu_custom_call.1} parent=35 // pred_region
          %206 = dma.done %s199, 512
        $region40: #{tpu_custom_call.1} parent=35 // pred_fallthru
          _
        // Predicated region
        $region41: #{tpu_custom_call.1} parent=35 // pred_check
          %p207 = pneg %p106
        $region42: #{tpu_custom_call.1} parent=35 // pred_check_branch
          %209 = sbr.rel (%p207) target = $region44
        $region43: #{tpu_custom_call.1} parent=35 // pred_region
          %210 = dma.done [#allocation6], 8192
        $region44: #{tpu_custom_call.1} parent=35 // pred_fallthru
          _
        %s211 = sand.u32 %s30, 1
        %s212 = scalar_lea.sflag [#allocation3], %s211
        %s213 = sand.u32 %s30, 1
        %s214 = smul.addr %s213, 32
        %s215 = scalar_lea.vmem [#allocation2], %s214
        %p216 = pneg %p43
        %p217 = pneg %p40
        %p218 = pneg %p64
        %p219 = pneg %p61
        %p220 = pneg %p85
        %p221 = pneg %p82
        %p222 = pneg %p106
        %p223 = pneg %p103
        %p224 = pneg %p132
        %p225 = pneg %p129
        %s226 = sand.u32 %s119, 1
        %s227 = scalar_lea.sflag [#allocation4], %s226
        %s228 = sand.u32 %s119, 1
        %s229 = smul.addr %s228, 32
        %s230 = scalar_lea.vmem [#allocation7], %s229
        %v231 = vld [vmem:[%s202] sm:$0xff]
        %v232 = vld [vmem:[%s202 + $0x8] sm:$0xff]
        %v233 = vld [vmem:[%s202 + $0x10] sm:$0xff]
        %v234 = vld [vmem:[%s202 + $0x18] sm:$0xff]
        %v235 = vadd.f32 %v231, %v232
        %236 = vadd.xlane.f32.xlu0 %v235
        %v237 = vpop.xlane.xlu0 %236
        %v238 = vadd.f32 %v233, %v234
        %239 = vadd.xlane.f32.xlu0 %v238
        %v240 = vpop.xlane.xlu0 %239
        %v241 = vrcp.pop 256.0
        %v242 = vmul.f32 %v237, %v241
        %v243 = vmul.f32 %v240, %v241
        %v244 = vmax.f32 %v231, %v232
        %245 = vmax.xlane.f32.xlu0 %v244
        %v246 = vpop.xlane.xlu0 %245
        %v247 = vmax.f32 %v233, %v234
        %248 = vmax.xlane.f32.xlu0 %v247
        %v249 = vpop.xlane.xlu0 %248
        %v252 = vlaneseq
        %v253 = vand.u32 %v252, 127
        %v254 = vlaneseq
        %v255 = vshrl.u32 %v254, 7
        %v256 = vsub.s32 %v253, %v255
        %v257 = vrot.slane %v242, %v256
        %v258 = vadd.s32 %v253, 4294967288
        %v259 = vlaneseq
        %v260 = vshrl.u32 %v259, 7
        %v261 = vsub.s32 %v258, %v260
        %v262 = vrot.slane %v243, %v261
        %vm263 = vcmask 130112
        %v264 = vsel %vm263, %v262, %v257
        %v268 = vlaneseq
        %v269 = vshrl.u32 %v268, 7
        %v270 = vsub.s32 %v253, %v269
        %v271 = vrot.slane %v246, %v270
        %v272 = vlaneseq
        %v273 = vshrl.u32 %v272, 7
        %v274 = vsub.s32 %v258, %v273
        %v275 = vrot.slane %v249, %v274
        %v276 = vsel %vm263, %v275, %v271
        %vm278 = vcmask 1040384
        %v279 = vsel %vm278, %v264, %v276
        %v280 = vld [vmem:[%s1] sm:$0xff]
        %v281 = vld [vmem:[%s1 + $0x8] sm:$0xff]
        %vm282 = vcmask 130048
        %v284 = vsel %vm282, %v279, 0
        %286 = vmatprep.subr.mxu0 0.0
        %v287 = vand.u32 %v280, 4294901760
        %288 = vmatpush1.msra.mxu0 %v287
        %289 = vmatprep.subr.mxu0 0.0
        %v290 = vand.u32 %v281, 4294901760
        %291 = vmatpush1.msra.mxu0 %v290
        %292 = vmatprep.subr.mxu0 0.0
        %293 = vmatpush1.msra.mxu0 0.0
        %294 = vmatprep.subr.mxu0 0.0
        %295 = vmatpush1.msra.mxu0 0.0
        %296 = vmatprep.subr.mxu0 0.0
        %297 = vmatpush1.msra.mxu0 0.0
        %298 = vmatprep.subr.mxu0 0.0
        %299 = vmatpush1.msra.mxu0 0.0
        %300 = vmatprep.subr.mxu0 0.0
        %301 = vmatpush1.msra.mxu0 0.0
        %302 = vmatprep.subr.mxu0 0.0
        %303 = vmatpush1.msra.mxu0 0.0
        %304 = vmatprep.subr.mxu0 0.0
        %305 = vmatpush1.msra.mxu0 0.0
        %306 = vmatprep.subr.mxu0 0.0
        %307 = vmatpush1.msra.mxu0 0.0
        %308 = vmatprep.subr.mxu0 0.0
        %309 = vmatpush1.msra.mxu0 0.0
        %310 = vmatprep.subr.mxu0 0.0
        %311 = vmatpush1.msra.mxu0 0.0
        %312 = vmatprep.subr.mxu0 0.0
        %313 = vmatpush1.msra.mxu0 0.0
        %314 = vmatprep.subr.mxu0 0.0
        %315 = vmatpush1.msra.mxu0 0.0
        %316 = vmatprep.subr.mxu0 0.0
        %317 = vmatpush1.msra.mxu0 0.0
        %318 = vmatprep.subr.mxu0 0.0
        %319 = vmatpush1.msra.mxu0 0.0
        %320 = vmatprep.subr.mxu0 0.0
        %321 = vmatpush1.msra.mxu0 0.0
        %322 = vmatprep.subr.mxu0 0.0
        %323 = vmatpush1.msra.mxu0 0.0
        %324 = vmatprep.subr.mxu0 0.0
        %325 = vmatpush1.msra.mxu0 0.0
        %326 = vmatprep.subr.mxu0 0.0
        %327 = vmatpush1.msra.mxu0 0.0
        %328 = vmatprep.subr.mxu0 0.0
        %329 = vmatpush1.msra.mxu0 0.0
        %330 = vmatprep.subr.mxu0 0.0
        %331 = vmatpush1.msra.mxu0 0.0
        %332 = vmatprep.subr.mxu0 0.0
        %333 = vmatpush1.msra.mxu0 0.0
        %334 = vmatprep.subr.mxu0 0.0
        %335 = vmatpush1.msra.mxu0 0.0
        %336 = vmatprep.subr.mxu0 0.0
        %337 = vmatpush1.msra.mxu0 0.0
        %338 = vmatprep.subr.mxu0 0.0
        %339 = vmatpush1.msra.mxu0 0.0
        %340 = vmatprep.subr.mxu0 0.0
        %341 = vmatpush1.msra.mxu0 0.0
        %342 = vmatprep.subr.mxu0 0.0
        %343 = vmatpush1.msra.mxu0 0.0
        %344 = vmatprep.subr.mxu0 0.0
        %345 = vmatpush1.msra.mxu0 0.0
        %346 = vmatprep.subr.mxu0 0.0
        %347 = vmatpush1.msra.mxu0 0.0
        %348 = vmatprep.subr.mxu0 0.0
        %349 = vmatpush1.msra.mxu0 0.0
        %350 = vmatprep.subr.mxu0 0.0
        %351 = vmatpush1.msra.mxu0 0.0
        %352 = vmatprep.mubr.f32.mxu0 0.0
        %v353 = vand.u32 %v284, 4294901760
        %v354 = vsub.f32 %v284, %v353
        %v355 = vand.u32 %v354, 4294901760
        %v356 = vsub.f32 %v354, %v355
        %v357 = vand.u32 %v356, 4294901760
        %358 = vmatmul.mubr.f32.gmra.mrb[0].mxu0 %v357
        %v359 = vpop.f32.mrb[0].mxu0
        %v360 = vadd.f32 0.0, %v359
        %v361 = vpop.f32.mrb[0].mxu0
        %362 = vdwg.mxu0
        %363 = vmatprep.subr.mxu0 0.0
        %v364 = vand.u32 %v280, 4294901760
        %v365 = vsub.f32 %v280, %v364
        %v366 = vand.u32 %v365, 4294901760
        %v367 = vsub.f32 %v365, %v366
        %v368 = vand.u32 %v367, 4294901760
        %369 = vmatpush1.msra.mxu0 %v368
        %370 = vmatprep.subr.mxu0 0.0
        %v371 = vand.u32 %v281, 4294901760
        %v372 = vsub.f32 %v281, %v371
        %v373 = vand.u32 %v372, 4294901760
        %v374 = vsub.f32 %v372, %v373
        %v375 = vand.u32 %v374, 4294901760
        %376 = vmatpush1.msra.mxu0 %v375
        %377 = vmatprep.subr.mxu0 0.0
        %378 = vmatpush1.msra.mxu0 0.0
        %379 = vmatprep.subr.mxu0 0.0
        %380 = vmatpush1.msra.mxu0 0.0
        %381 = vmatprep.subr.mxu0 0.0
        %382 = vmatpush1.msra.mxu0 0.0
        %383 = vmatprep.subr.mxu0 0.0
        %384 = vmatpush1.msra.mxu0 0.0
        %385 = vmatprep.subr.mxu0 0.0
        %386 = vmatpush1.msra.mxu0 0.0
        %387 = vmatprep.subr.mxu0 0.0
        %388 = vmatpush1.msra.mxu0 0.0
        %389 = vmatprep.subr.mxu0 0.0
        %390 = vmatpush1.msra.mxu0 0.0
        %391 = vmatprep.subr.mxu0 0.0
        %392 = vmatpush1.msra.mxu0 0.0
        %393 = vmatprep.subr.mxu0 0.0
        %394 = vmatpush1.msra.mxu0 0.0
        %395 = vmatprep.subr.mxu0 0.0
        %396 = vmatpush1.msra.mxu0 0.0
        %397 = vmatprep.subr.mxu0 0.0
        %398 = vmatpush1.msra.mxu0 0.0
        %399 = vmatprep.subr.mxu0 0.0
        %400 = vmatpush1.msra.mxu0 0.0
        %401 = vmatprep.subr.mxu0 0.0
        %402 = vmatpush1.msra.mxu0 0.0
        %403 = vmatprep.subr.mxu0 0.0
        %404 = vmatpush1.msra.mxu0 0.0
        %405 = vmatprep.subr.mxu0 0.0
        %406 = vmatpush1.msra.mxu0 0.0
        %407 = vmatprep.subr.mxu0 0.0
        %408 = vmatpush1.msra.mxu0 0.0
        %409 = vmatprep.subr.mxu0 0.0
        %410 = vmatpush1.msra.mxu0 0.0
        %411 = vmatprep.subr.mxu0 0.0
        %412 = vmatpush1.msra.mxu0 0.0
        %413 = vmatprep.subr.mxu0 0.0
        %414 = vmatpush1.msra.mxu0 0.0
        %415 = vmatprep.subr.mxu0 0.0
        %416 = vmatpush1.msra.mxu0 0.0
        %417 = vmatprep.subr.mxu0 0.0
        %418 = vmatpush1.msra.mxu0 0.0
        %419 = vmatprep.subr.mxu0 0.0
        %420 = vmatpush1.msra.mxu0 0.0
        %421 = vmatprep.subr.mxu0 0.0
        %422 = vmatpush1.msra.mxu0 0.0
        %423 = vmatprep.subr.mxu0 0.0
        %424 = vmatpush1.msra.mxu0 0.0
        %425 = vmatprep.subr.mxu0 0.0
        %426 = vmatpush1.msra.mxu0 0.0
        %427 = vmatprep.subr.mxu0 0.0
        %428 = vmatpush1.msra.mxu0 0.0
        %429 = vmatprep.subr.mxu0 0.0
        %430 = vmatpush1.msra.mxu0 0.0
        %431 = vmatprep.subr.mxu0 0.0
        %432 = vmatpush1.msra.mxu0 0.0
        %433 = vmatprep.subr.mxu0 0.0
        %434 = vmatpush1.msra.mxu0 0.0
        %435 = vmatprep.subr.mxu0 0.0
        %436 = vmatpush1.msra.mxu0 0.0
        %437 = vmatprep.mubr.f32.mxu0 0.0
        %v438 = vand.u32 %v284, 4294901760
        %439 = vmatmul.mubr.f32.gmra.mrb[0].mxu0 %v438
        %v440 = vpop.f32.mrb[0].mxu0
        %v441 = vadd.f32 %v360, %v440
        %v442 = vpop.f32.mrb[0].mxu0
        %443 = vdwg.mxu0
        %444 = vmatprep.subr.mxu0 0.0
        %v445 = vand.u32 %v280, 4294901760
        %v446 = vsub.f32 %v280, %v445
        %447 = vmatpush1.msra.mxu0 %v446
        %448 = vmatprep.subr.mxu0 0.0
        %v449 = vand.u32 %v281, 4294901760
        %v450 = vsub.f32 %v281, %v449
        %451 = vmatpush1.msra.mxu0 %v450
        %452 = vmatprep.subr.mxu0 0.0
        %453 = vmatpush1.msra.mxu0 0.0
        %454 = vmatprep.subr.mxu0 0.0
        %455 = vmatpush1.msra.mxu0 0.0
        %456 = vmatprep.subr.mxu0 0.0
        %457 = vmatpush1.msra.mxu0 0.0
        %458 = vmatprep.subr.mxu0 0.0
        %459 = vmatpush1.msra.mxu0 0.0
        %460 = vmatprep.subr.mxu0 0.0
        %461 = vmatpush1.msra.mxu0 0.0
        %462 = vmatprep.subr.mxu0 0.0
        %463 = vmatpush1.msra.mxu0 0.0
        %464 = vmatprep.subr.mxu0 0.0
        %465 = vmatpush1.msra.mxu0 0.0
        %466 = vmatprep.subr.mxu0 0.0
        %467 = vmatpush1.msra.mxu0 0.0
        %468 = vmatprep.subr.mxu0 0.0
        %469 = vmatpush1.msra.mxu0 0.0
        %470 = vmatprep.subr.mxu0 0.0
        %471 = vmatpush1.msra.mxu0 0.0
        %472 = vmatprep.subr.mxu0 0.0
        %473 = vmatpush1.msra.mxu0 0.0
        %474 = vmatprep.subr.mxu0 0.0
        %475 = vmatpush1.msra.mxu0 0.0
        %476 = vmatprep.subr.mxu0 0.0
        %477 = vmatpush1.msra.mxu0 0.0
        %478 = vmatprep.subr.mxu0 0.0
        %479 = vmatpush1.msra.mxu0 0.0
        %480 = vmatprep.subr.mxu0 0.0
        %481 = vmatpush1.msra.mxu0 0.0
        %482 = vmatprep.subr.mxu0 0.0
        %483 = vmatpush1.msra.mxu0 0.0
        %484 = vmatprep.subr.mxu0 0.0
        %485 = vmatpush1.msra.mxu0 0.0
        %486 = vmatprep.subr.mxu0 0.0
        %487 = vmatpush1.msra.mxu0 0.0
        %488 = vmatprep.subr.mxu0 0.0
        %489 = vmatpush1.msra.mxu0 0.0
        %490 = vmatprep.subr.mxu0 0.0
        %491 = vmatpush1.msra.mxu0 0.0
        %492 = vmatprep.subr.mxu0 0.0
        %493 = vmatpush1.msra.mxu0 0.0
        %494 = vmatprep.subr.mxu0 0.0
        %495 = vmatpush1.msra.mxu0 0.0
        %496 = vmatprep.subr.mxu0 0.0
        %497 = vmatpush1.msra.mxu0 0.0
        %498 = vmatprep.subr.mxu0 0.0
        %499 = vmatpush1.msra.mxu0 0.0
        %500 = vmatprep.subr.mxu0 0.0
        %501 = vmatpush1.msra.mxu0 0.0
        %502 = vmatprep.subr.mxu0 0.0
        %503 = vmatpush1.msra.mxu0 0.0
        %504 = vmatprep.subr.mxu0 0.0
        %505 = vmatpush1.msra.mxu0 0.0
        %506 = vmatprep.subr.mxu0 0.0
        %507 = vmatpush1.msra.mxu0 0.0
        %508 = vmatprep.subr.mxu0 0.0
        %509 = vmatpush1.msra.mxu0 0.0
        %510 = vmatprep.subr.mxu0 0.0
        %511 = vmatpush1.msra.mxu0 0.0
        %512 = vmatprep.mubr.f32.mxu0 0.0
        %v513 = vand.u32 %v284, 4294901760
        %v514 = vsub.f32 %v284, %v513
        %515 = vmatmul.mubr.f32.gmra.mrb[0].mxu0 %v514
        %v516 = vpop.f32.mrb[0].mxu0
        %v517 = vadd.f32 %v441, %v516
        %v518 = vpop.f32.mrb[0].mxu0
        %519 = vdwg.mxu0
        %520 = vmatprep.subr.mxu0 0.0
        %v521 = vand.u32 %v280, 4294901760
        %522 = vmatpush1.msra.mxu0 %v521
        %523 = vmatprep.subr.mxu0 0.0
        %v524 = vand.u32 %v281, 4294901760
        %525 = vmatpush1.msra.mxu0 %v524
        %526 = vmatprep.subr.mxu0 0.0
        %527 = vmatpush1.msra.mxu0 0.0
        %528 = vmatprep.subr.mxu0 0.0
        %529 = vmatpush1.msra.mxu0 0.0
        %530 = vmatprep.subr.mxu0 0.0
        %531 = vmatpush1.msra.mxu0 0.0
        %532 = vmatprep.subr.mxu0 0.0
        %533 = vmatpush1.msra.mxu0 0.0
        %534 = vmatprep.subr.mxu0 0.0
        %535 = vmatpush1.msra.mxu0 0.0
        %536 = vmatprep.subr.mxu0 0.0
        %537 = vmatpush1.msra.mxu0 0.0
        %538 = vmatprep.subr.mxu0 0.0
        %539 = vmatpush1.msra.mxu0 0.0
        %540 = vmatprep.subr.mxu0 0.0
        %541 = vmatpush1.msra.mxu0 0.0
        %542 = vmatprep.subr.mxu0 0.0
        %543 = vmatpush1.msra.mxu0 0.0
        %544 = vmatprep.subr.mxu0 0.0
        %545 = vmatpush1.msra.mxu0 0.0
        %546 = vmatprep.subr.mxu0 0.0
        %547 = vmatpush1.msra.mxu0 0.0
        %548 = vmatprep.subr.mxu0 0.0
        %549 = vmatpush1.msra.mxu0 0.0
        %550 = vmatprep.subr.mxu0 0.0
        %551 = vmatpush1.msra.mxu0 0.0
        %552 = vmatprep.subr.mxu0 0.0
        %553 = vmatpush1.msra.mxu0 0.0
        %554 = vmatprep.subr.mxu0 0.0
        %555 = vmatpush1.msra.mxu0 0.0
        %556 = vmatprep.subr.mxu0 0.0
        %557 = vmatpush1.msra.mxu0 0.0
        %558 = vmatprep.subr.mxu0 0.0
        %559 = vmatpush1.msra.mxu0 0.0
        %560 = vmatprep.subr.mxu0 0.0
        %561 = vmatpush1.msra.mxu0 0.0
        %562 = vmatprep.subr.mxu0 0.0
        %563 = vmatpush1.msra.mxu0 0.0
        %564 = vmatprep.subr.mxu0 0.0
        %565 = vmatpush1.msra.mxu0 0.0
        %566 = vmatprep.subr.mxu0 0.0
        %567 = vmatpush1.msra.mxu0 0.0
        %568 = vmatprep.subr.mxu0 0.0
        %569 = vmatpush1.msra.mxu0 0.0
        %570 = vmatprep.subr.mxu0 0.0
        %571 = vmatpush1.msra.mxu0 0.0
        %572 = vmatprep.subr.mxu0 0.0
        %573 = vmatpush1.msra.mxu0 0.0
        %574 = vmatprep.subr.mxu0 0.0
        %575 = vmatpush1.msra.mxu0 0.0
        %576 = vmatprep.subr.mxu0 0.0
        %577 = vmatpush1.msra.mxu0 0.0
        %578 = vmatprep.subr.mxu0 0.0
        %579 = vmatpush1.msra.mxu0 0.0
        %580 = vmatprep.subr.mxu0 0.0
        %581 = vmatpush1.msra.mxu0 0.0
        %582 = vmatprep.subr.mxu0 0.0
        %583 = vmatpush1.msra.mxu0 0.0
        %584 = vmatprep.subr.mxu0 0.0
        %585 = vmatpush1.msra.mxu0 0.0
        %586 = vmatprep.mubr.f32.mxu0 0.0
        %v587 = vand.u32 %v284, 4294901760
        %v588 = vsub.f32 %v284, %v587
        %v589 = vand.u32 %v588, 4294901760
        %590 = vmatmul.mubr.f32.gmra.mrb[0].mxu0 %v589
        %v591 = vpop.f32.mrb[0].mxu0
        %v592 = vadd.f32 %v517, %v591
        %v593 = vpop.f32.mrb[0].mxu0
        %594 = vdwg.mxu0
        %595 = vmatprep.subr.mxu0 0.0
        %v596 = vand.u32 %v280, 4294901760
        %v597 = vsub.f32 %v280, %v596
        %v598 = vand.u32 %v597, 4294901760
        %599 = vmatpush1.msra.mxu0 %v598
        %600 = vmatprep.subr.mxu0 0.0
        %v601 = vand.u32 %v281, 4294901760
        %v602 = vsub.f32 %v281, %v601
        %v603 = vand.u32 %v602, 4294901760
        %604 = vmatpush1.msra.mxu0 %v603
        %605 = vmatprep.subr.mxu0 0.0
        %606 = vmatpush1.msra.mxu0 0.0
        %607 = vmatprep.subr.mxu0 0.0
        %608 = vmatpush1.msra.mxu0 0.0
        %609 = vmatprep.subr.mxu0 0.0
        %610 = vmatpush1.msra.mxu0 0.0
        %611 = vmatprep.subr.mxu0 0.0
        %612 = vmatpush1.msra.mxu0 0.0
        %613 = vmatprep.subr.mxu0 0.0
        %614 = vmatpush1.msra.mxu0 0.0
        %615 = vmatprep.subr.mxu0 0.0
        %616 = vmatpush1.msra.mxu0 0.0
        %617 = vmatprep.subr.mxu0 0.0
        %618 = vmatpush1.msra.mxu0 0.0
        %619 = vmatprep.subr.mxu0 0.0
        %620 = vmatpush1.msra.mxu0 0.0
        %621 = vmatprep.subr.mxu0 0.0
        %622 = vmatpush1.msra.mxu0 0.0
        %623 = vmatprep.subr.mxu0 0.0
        %624 = vmatpush1.msra.mxu0 0.0
        %625 = vmatprep.subr.mxu0 0.0
        %626 = vmatpush1.msra.mxu0 0.0
        %627 = vmatprep.subr.mxu0 0.0
        %628 = vmatpush1.msra.mxu0 0.0
        %629 = vmatprep.subr.mxu0 0.0
        %630 = vmatpush1.msra.mxu0 0.0
        %631 = vmatprep.subr.mxu0 0.0
        %632 = vmatpush1.msra.mxu0 0.0
        %633 = vmatprep.subr.mxu0 0.0
        %634 = vmatpush1.msra.mxu0 0.0
        %635 = vmatprep.subr.mxu0 0.0
        %636 = vmatpush1.msra.mxu0 0.0
        %637 = vmatprep.subr.mxu0 0.0
        %638 = vmatpush1.msra.mxu0 0.0
        %639 = vmatprep.subr.mxu0 0.0
        %640 = vmatpush1.msra.mxu0 0.0
        %641 = vmatprep.subr.mxu0 0.0
        %642 = vmatpush1.msra.mxu0 0.0
        %643 = vmatprep.subr.mxu0 0.0
        %644 = vmatpush1.msra.mxu0 0.0
        %645 = vmatprep.subr.mxu0 0.0
        %646 = vmatpush1.msra.mxu0 0.0
        %647 = vmatprep.subr.mxu0 0.0
        %648 = vmatpush1.msra.mxu0 0.0
        %649 = vmatprep.subr.mxu0 0.0
        %650 = vmatpush1.msra.mxu0 0.0
        %651 = vmatprep.subr.mxu0 0.0
        %652 = vmatpush1.msra.mxu0 0.0
        %653 = vmatprep.subr.mxu0 0.0
        %654 = vmatpush1.msra.mxu0 0.0
        %655 = vmatprep.subr.mxu0 0.0
        %656 = vmatpush1.msra.mxu0 0.0
        %657 = vmatprep.subr.mxu0 0.0
        %658 = vmatpush1.msra.mxu0 0.0
        %659 = vmatprep.subr.mxu0 0.0
        %660 = vmatpush1.msra.mxu0 0.0
        %661 = vmatprep.subr.mxu0 0.0
        %662 = vmatpush1.msra.mxu0 0.0
        %663 = vmatprep.subr.mxu0 0.0
        %664 = vmatpush1.msra.mxu0 0.0
        %665 = vmatprep.mubr.f32.mxu0 0.0
        %v666 = vand.u32 %v284, 4294901760
        %667 = vmatmul.mubr.f32.gmra.mrb[0].mxu0 %v666
        %v668 = vpop.f32.mrb[0].mxu0
        %v669 = vadd.f32 %v592, %v668
        %v670 = vpop.f32.mrb[0].mxu0
        %671 = vdwg.mxu0
        %672 = vmatprep.subr.mxu0 0.0
        %v673 = vand.u32 %v280, 4294901760
        %674 = vmatpush1.msra.mxu0 %v673
        %675 = vmatprep.subr.mxu0 0.0
        %v676 = vand.u32 %v281, 4294901760
        %677 = vmatpush1.msra.mxu0 %v676
        %678 = vmatprep.subr.mxu0 0.0
        %679 = vmatpush1.msra.mxu0 0.0
        %680 = vmatprep.subr.mxu0 0.0
        %681 = vmatpush1.msra.mxu0 0.0
        %682 = vmatprep.subr.mxu0 0.0
        %683 = vmatpush1.msra.mxu0 0.0
        %684 = vmatprep.subr.mxu0 0.0
        %685 = vmatpush1.msra.mxu0 0.0
        %686 = vmatprep.subr.mxu0 0.0
        %687 = vmatpush1.msra.mxu0 0.0
        %688 = vmatprep.subr.mxu0 0.0
        %689 = vmatpush1.msra.mxu0 0.0
        %690 = vmatprep.subr.mxu0 0.0
        %691 = vmatpush1.msra.mxu0 0.0
        %692 = vmatprep.subr.mxu0 0.0
        %693 = vmatpush1.msra.mxu0 0.0
        %694 = vmatprep.subr.mxu0 0.0
        %695 = vmatpush1.msra.mxu0 0.0
        %696 = vmatprep.subr.mxu0 0.0
        %697 = vmatpush1.msra.mxu0 0.0
        %698 = vmatprep.subr.mxu0 0.0
        %699 = vmatpush1.msra.mxu0 0.0
        %700 = vmatprep.subr.mxu0 0.0
        %701 = vmatpush1.msra.mxu0 0.0
        %702 = vmatprep.subr.mxu0 0.0
        %703 = vmatpush1.msra.mxu0 0.0
        %704 = vmatprep.subr.mxu0 0.0
        %705 = vmatpush1.msra.mxu0 0.0
        %706 = vmatprep.subr.mxu0 0.0
        %707 = vmatpush1.msra.mxu0 0.0
        %708 = vmatprep.subr.mxu0 0.0
        %709 = vmatpush1.msra.mxu0 0.0
        %710 = vmatprep.subr.mxu0 0.0
        %711 = vmatpush1.msra.mxu0 0.0
        %712 = vmatprep.subr.mxu0 0.0
        %713 = vmatpush1.msra.mxu0 0.0
        %714 = vmatprep.subr.mxu0 0.0
        %715 = vmatpush1.msra.mxu0 0.0
        %716 = vmatprep.subr.mxu0 0.0
        %717 = vmatpush1.msra.mxu0 0.0
        %718 = vmatprep.subr.mxu0 0.0
        %719 = vmatpush1.msra.mxu0 0.0
        %720 = vmatprep.subr.mxu0 0.0
        %721 = vmatpush1.msra.mxu0 0.0
        %722 = vmatprep.subr.mxu0 0.0
        %723 = vmatpush1.msra.mxu0 0.0
        %724 = vmatprep.subr.mxu0 0.0
        %725 = vmatpush1.msra.mxu0 0.0
        %726 = vmatprep.subr.mxu0 0.0
        %727 = vmatpush1.msra.mxu0 0.0
        %728 = vmatprep.subr.mxu0 0.0
        %729 = vmatpush1.msra.mxu0 0.0
        %730 = vmatprep.subr.mxu0 0.0
        %731 = vmatpush1.msra.mxu0 0.0
        %732 = vmatprep.subr.mxu0 0.0
        %733 = vmatpush1.msra.mxu0 0.0
        %734 = vmatprep.subr.mxu0 0.0
        %735 = vmatpush1.msra.mxu0 0.0
        %736 = vmatprep.subr.mxu0 0.0
        %737 = vmatpush1.msra.mxu0 0.0
        %738 = vmatprep.mubr.f32.mxu0 0.0
        %v739 = vand.u32 %v284, 4294901760
        %740 = vmatmul.mubr.f32.gmra.mrb[0].mxu0 %v739
        %v741 = vpop.f32.mrb[0].mxu0
        %v742 = vadd.f32 %v669, %v741
        %v743 = vpop.f32.mrb[0].mxu0
        %744 = vdwg.mxu0
        %v745 = vmax.f32 %v742, 0.0
        %v746 = vld [vmem:[%s2] sm:$0x3]
        %vm747 = vcmask 15360
        %v749 = vsel %vm747, %v745, 0
        %vm751 = vcmask 1041408
        %v753 = vsel %vm751, %v746, 0
        %755 = vmatprep.subr.mxu0 0.0
        %v756 = vand.u32 %v753, 4294901760
        %757 = vmatpush1.msra.mxu0 %v756
        %758 = vmatprep.subr.mxu0 0.0
        %759 = vmatpush1.msra.mxu0 0.0
        %760 = vmatprep.subr.mxu0 0.0
        %761 = vmatpush1.msra.mxu0 0.0
        %762 = vmatprep.subr.mxu0 0.0
        %763 = vmatpush1.msra.mxu0 0.0
        %764 = vmatprep.subr.mxu0 0.0
        %765 = vmatpush1.msra.mxu0 0.0
        %766 = vmatprep.subr.mxu0 0.0
        %767 = vmatpush1.msra.mxu0 0.0
        %768 = vmatprep.subr.mxu0 0.0
        %769 = vmatpush1.msra.mxu0 0.0
        %770 = vmatprep.subr.mxu0 0.0
        %771 = vmatpush1.msra.mxu0 0.0
        %772 = vmatprep.subr.mxu0 0.0
        %773 = vmatpush1.msra.mxu0 0.0
        %774 = vmatprep.subr.mxu0 0.0
        %775 = vmatpush1.msra.mxu0 0.0
        %776 = vmatprep.subr.mxu0 0.0
        %777 = vmatpush1.msra.mxu0 0.0
        %778 = vmatprep.subr.mxu0 0.0
        %779 = vmatpush1.msra.mxu0 0.0
        %780 = vmatprep.subr.mxu0 0.0
        %781 = vmatpush1.msra.mxu0 0.0
        %782 = vmatprep.subr.mxu0 0.0
        %783 = vmatpush1.msra.mxu0 0.0
        %784 = vmatprep.subr.mxu0 0.0
        %785 = vmatpush1.msra.mxu0 0.0
        %786 = vmatprep.subr.mxu0 0.0
        %787 = vmatpush1.msra.mxu0 0.0
        %788 = vmatprep.subr.mxu0 0.0
        %789 = vmatpush1.msra.mxu0 0.0
        %790 = vmatprep.subr.mxu0 0.0
        %791 = vmatpush1.msra.mxu0 0.0
        %792 = vmatprep.subr.mxu0 0.0
        %793 = vmatpush1.msra.mxu0 0.0
        %794 = vmatprep.subr.mxu0 0.0
        %795 = vmatpush1.msra.mxu0 0.0
        %796 = vmatprep.subr.mxu0 0.0
        %797 = vmatpush1.msra.mxu0 0.0
        %798 = vmatprep.subr.mxu0 0.0
        %799 = vmatpush1.msra.mxu0 0.0
        %800 = vmatprep.subr.mxu0 0.0
        %801 = vmatpush1.msra.mxu0 0.0
        %802 = vmatprep.subr.mxu0 0.0
        %803 = vmatpush1.msra.mxu0 0.0
        %804 = vmatprep.subr.mxu0 0.0
        %805 = vmatpush1.msra.mxu0 0.0
        %806 = vmatprep.subr.mxu0 0.0
        %807 = vmatpush1.msra.mxu0 0.0
        %808 = vmatprep.subr.mxu0 0.0
        %809 = vmatpush1.msra.mxu0 0.0
        %810 = vmatprep.subr.mxu0 0.0
        %811 = vmatpush1.msra.mxu0 0.0
        %812 = vmatprep.subr.mxu0 0.0
        %813 = vmatpush1.msra.mxu0 0.0
        %814 = vmatprep.subr.mxu0 0.0
        %815 = vmatpush1.msra.mxu0 0.0
        %816 = vmatprep.subr.mxu0 0.0
        %817 = vmatpush1.msra.mxu0 0.0
        %818 = vmatprep.subr.mxu0 0.0
        %819 = vmatpush1.msra.mxu0 0.0
        %820 = vmatprep.mubr.f32.mxu0 0.0
        %v821 = vand.u32 %v749, 4294901760
        %v822 = vsub.f32 %v749, %v821
        %v823 = vand.u32 %v822, 4294901760
        %v824 = vsub.f32 %v822, %v823
        %v825 = vand.u32 %v824, 4294901760
        %826 = vmatmul.mubr.f32.gmra.mrb[0].mxu0 %v825
        %v827 = vpop.f32.mrb[0].mxu0
        %v828 = vadd.f32 0.0, %v827
        %v829 = vpop.f32.mrb[0].mxu0
        %830 = vdwg.mxu0
        %831 = vmatprep.subr.mxu0 0.0
        %v832 = vand.u32 %v753, 4294901760
        %v833 = vsub.f32 %v753, %v832
        %v834 = vand.u32 %v833, 4294901760
        %v835 = vsub.f32 %v833, %v834
        %v836 = vand.u32 %v835, 4294901760
        %837 = vmatpush1.msra.mxu0 %v836
        %838 = vmatprep.subr.mxu0 0.0
        %839 = vmatpush1.msra.mxu0 0.0
        %840 = vmatprep.subr.mxu0 0.0
        %841 = vmatpush1.msra.mxu0 0.0
        %842 = vmatprep.subr.mxu0 0.0
        %843 = vmatpush1.msra.mxu0 0.0
        %844 = vmatprep.subr.mxu0 0.0
        %845 = vmatpush1.msra.mxu0 0.0
        %846 = vmatprep.subr.mxu0 0.0
        %847 = vmatpush1.msra.mxu0 0.0
        %848 = vmatprep.subr.mxu0 0.0
        %849 = vmatpush1.msra.mxu0 0.0
        %850 = vmatprep.subr.mxu0 0.0
        %851 = vmatpush1.msra.mxu0 0.0
        %852 = vmatprep.subr.mxu0 0.0
        %853 = vmatpush1.msra.mxu0 0.0
        %854 = vmatprep.subr.mxu0 0.0
        %855 = vmatpush1.msra.mxu0 0.0
        %856 = vmatprep.subr.mxu0 0.0
        %857 = vmatpush1.msra.mxu0 0.0
        %858 = vmatprep.subr.mxu0 0.0
        %859 = vmatpush1.msra.mxu0 0.0
        %860 = vmatprep.subr.mxu0 0.0
        %861 = vmatpush1.msra.mxu0 0.0
        %862 = vmatprep.subr.mxu0 0.0
        %863 = vmatpush1.msra.mxu0 0.0
        %864 = vmatprep.subr.mxu0 0.0
        %865 = vmatpush1.msra.mxu0 0.0
        %866 = vmatprep.subr.mxu0 0.0
        %867 = vmatpush1.msra.mxu0 0.0
        %868 = vmatprep.subr.mxu0 0.0
        %869 = vmatpush1.msra.mxu0 0.0
        %870 = vmatprep.subr.mxu0 0.0
        %871 = vmatpush1.msra.mxu0 0.0
        %872 = vmatprep.subr.mxu0 0.0
        %873 = vmatpush1.msra.mxu0 0.0
        %874 = vmatprep.subr.mxu0 0.0
        %875 = vmatpush1.msra.mxu0 0.0
        %876 = vmatprep.subr.mxu0 0.0
        %877 = vmatpush1.msra.mxu0 0.0
        %878 = vmatprep.subr.mxu0 0.0
        %879 = vmatpush1.msra.mxu0 0.0
        %880 = vmatprep.subr.mxu0 0.0
        %881 = vmatpush1.msra.mxu0 0.0
        %882 = vmatprep.subr.mxu0 0.0
        %883 = vmatpush1.msra.mxu0 0.0
        %884 = vmatprep.subr.mxu0 0.0
        %885 = vmatpush1.msra.mxu0 0.0
        %886 = vmatprep.subr.mxu0 0.0
        %887 = vmatpush1.msra.mxu0 0.0
        %888 = vmatprep.subr.mxu0 0.0
        %889 = vmatpush1.msra.mxu0 0.0
        %890 = vmatprep.subr.mxu0 0.0
        %891 = vmatpush1.msra.mxu0 0.0
        %892 = vmatprep.subr.mxu0 0.0
        %893 = vmatpush1.msra.mxu0 0.0
        %894 = vmatprep.subr.mxu0 0.0
        %895 = vmatpush1.msra.mxu0 0.0
        %896 = vmatprep.subr.mxu0 0.0
        %897 = vmatpush1.msra.mxu0 0.0
        %898 = vmatprep.subr.mxu0 0.0
        %899 = vmatpush1.msra.mxu0 0.0
        %900 = vmatprep.mubr.f32.mxu0 0.0
        %v901 = vand.u32 %v749, 4294901760
        %902 = vmatmul.mubr.f32.gmra.mrb[0].mxu0 %v901
        %v903 = vpop.f32.mrb[0].mxu0
        %v904 = vadd.f32 %v828, %v903
        %v905 = vpop.f32.mrb[0].mxu0
        %906 = vdwg.mxu0
        %907 = vmatprep.subr.mxu0 0.0
        %v908 = vand.u32 %v753, 4294901760
        %v909 = vsub.f32 %v753, %v908
        %910 = vmatpush1.msra.mxu0 %v909
        %911 = vmatprep.subr.mxu0 0.0
        %912 = vmatpush1.msra.mxu0 0.0
        %913 = vmatprep.subr.mxu0 0.0
        %914 = vmatpush1.msra.mxu0 0.0
        %915 = vmatprep.subr.mxu0 0.0
        %916 = vmatpush1.msra.mxu0 0.0
        %917 = vmatprep.subr.mxu0 0.0
        %918 = vmatpush1.msra.mxu0 0.0
        %919 = vmatprep.subr.mxu0 0.0
        %920 = vmatpush1.msra.mxu0 0.0
        %921 = vmatprep.subr.mxu0 0.0
        %922 = vmatpush1.msra.mxu0 0.0
        %923 = vmatprep.subr.mxu0 0.0
        %924 = vmatpush1.msra.mxu0 0.0
        %925 = vmatprep.subr.mxu0 0.0
        %926 = vmatpush1.msra.mxu0 0.0
        %927 = vmatprep.subr.mxu0 0.0
        %928 = vmatpush1.msra.mxu0 0.0
        %929 = vmatprep.subr.mxu0 0.0
        %930 = vmatpush1.msra.mxu0 0.0
        %931 = vmatprep.subr.mxu0 0.0
        %932 = vmatpush1.msra.mxu0 0.0
        %933 = vmatprep.subr.mxu0 0.0
        %934 = vmatpush1.msra.mxu0 0.0
        %935 = vmatprep.subr.mxu0 0.0
        %936 = vmatpush1.msra.mxu0 0.0
        %937 = vmatprep.subr.mxu0 0.0
        %938 = vmatpush1.msra.mxu0 0.0
        %939 = vmatprep.subr.mxu0 0.0
        %940 = vmatpush1.msra.mxu0 0.0
        %941 = vmatprep.subr.mxu0 0.0
        %942 = vmatpush1.msra.mxu0 0.0
        %943 = vmatprep.subr.mxu0 0.0
        %944 = vmatpush1.msra.mxu0 0.0
        %945 = vmatprep.subr.mxu0 0.0
        %946 = vmatpush1.msra.mxu0 0.0
        %947 = vmatprep.subr.mxu0 0.0
        %948 = vmatpush1.msra.mxu0 0.0
        %949 = vmatprep.subr.mxu0 0.0
        %950 = vmatpush1.msra.mxu0 0.0
        %951 = vmatprep.subr.mxu0 0.0
        %952 = vmatpush1.msra.mxu0 0.0
        %953 = vmatprep.subr.mxu0 0.0
        %954 = vmatpush1.msra.mxu0 0.0
        %955 = vmatprep.subr.mxu0 0.0
        %956 = vmatpush1.msra.mxu0 0.0
        %957 = vmatprep.subr.mxu0 0.0
        %958 = vmatpush1.msra.mxu0 0.0
        %959 = vmatprep.subr.mxu0 0.0
        %960 = vmatpush1.msra.mxu0 0.0
        %961 = vmatprep.subr.mxu0 0.0
        %962 = vmatpush1.msra.mxu0 0.0
        %963 = vmatprep.subr.mxu0 0.0
        %964 = vmatpush1.msra.mxu0 0.0
        %965 = vmatprep.subr.mxu0 0.0
        %966 = vmatpush1.msra.mxu0 0.0
        %967 = vmatprep.subr.mxu0 0.0
        %968 = vmatpush1.msra.mxu0 0.0
        %969 = vmatprep.subr.mxu0 0.0
        %970 = vmatpush1.msra.mxu0 0.0
        %971 = vmatprep.subr.mxu0 0.0
        %972 = vmatpush1.msra.mxu0 0.0
        %973 = vmatprep.mubr.f32.mxu0 0.0
        %v974 = vand.u32 %v749, 4294901760
        %v975 = vsub.f32 %v749, %v974
        %976 = vmatmul.mubr.f32.gmra.mrb[0].mxu0 %v975
        %v977 = vpop.f32.mrb[0].mxu0
        %v978 = vadd.f32 %v904, %v977
        %v979 = vpop.f32.mrb[0].mxu0
        %980 = vdwg.mxu0
        %981 = vmatprep.subr.mxu0 0.0
        %v982 = vand.u32 %v753, 4294901760
        %983 = vmatpush1.msra.mxu0 %v982
        %984 = vmatprep.subr.mxu0 0.0
        %985 = vmatpush1.msra.mxu0 0.0
        %986 = vmatprep.subr.mxu0 0.0
        %987 = vmatpush1.msra.mxu0 0.0
        %988 = vmatprep.subr.mxu0 0.0
        %989 = vmatpush1.msra.mxu0 0.0
        %990 = vmatprep.subr.mxu0 0.0
        %991 = vmatpush1.msra.mxu0 0.0
        %992 = vmatprep.subr.mxu0 0.0
        %993 = vmatpush1.msra.mxu0 0.0
        %994 = vmatprep.subr.mxu0 0.0
        %995 = vmatpush1.msra.mxu0 0.0
        %996 = vmatprep.subr.mxu0 0.0
        %997 = vmatpush1.msra.mxu0 0.0
        %998 = vmatprep.subr.mxu0 0.0
        %999 = vmatpush1.msra.mxu0 0.0
        %1000 = vmatprep.subr.mxu0 0.0
        %1001 = vmatpush1.msra.mxu0 0.0
        %1002 = vmatprep.subr.mxu0 0.0
        %1003 = vmatpush1.msra.mxu0 0.0
        %1004 = vmatprep.subr.mxu0 0.0
        %1005 = vmatpush1.msra.mxu0 0.0
        %1006 = vmatprep.subr.mxu0 0.0
        %1007 = vmatpush1.msra.mxu0 0.0
        %1008 = vmatprep.subr.mxu0 0.0
        %1009 = vmatpush1.msra.mxu0 0.0
        %1010 = vmatprep.subr.mxu0 0.0
        %1011 = vmatpush1.msra.mxu0 0.0
        %1012 = vmatprep.subr.mxu0 0.0
        %1013 = vmatpush1.msra.mxu0 0.0
        %1014 = vmatprep.subr.mxu0 0.0
        %1015 = vmatpush1.msra.mxu0 0.0
        %1016 = vmatprep.subr.mxu0 0.0
        %1017 = vmatpush1.msra.mxu0 0.0
        %1018 = vmatprep.subr.mxu0 0.0
        %1019 = vmatpush1.msra.mxu0 0.0
        %1020 = vmatprep.subr.mxu0 0.0
        %1021 = vmatpush1.msra.mxu0 0.0
        %1022 = vmatprep.subr.mxu0 0.0
        %1023 = vmatpush1.msra.mxu0 0.0
        %1024 = vmatprep.subr.mxu0 0.0
        %1025 = vmatpush1.msra.mxu0 0.0
        %1026 = vmatprep.subr.mxu0 0.0
        %1027 = vmatpush1.msra.mxu0 0.0
        %1028 = vmatprep.subr.mxu0 0.0
        %1029 = vmatpush1.msra.mxu0 0.0
        %1030 = vmatprep.subr.mxu0 0.0
        %1031 = vmatpush1.msra.mxu0 0.0
        %1032 = vmatprep.subr.mxu0 0.0
        %1033 = vmatpush1.msra.mxu0 0.0
        %1034 = vmatprep.subr.mxu0 0.0
        %1035 = vmatpush1.msra.mxu0 0.0
        %1036 = vmatprep.subr.mxu0 0.0
        %1037 = vmatpush1.msra.mxu0 0.0
        %1038 = vmatprep.subr.mxu0 0.0
        %1039 = vmatpush1.msra.mxu0 0.0
        %1040 = vmatprep.subr.mxu0 0.0
        %1041 = vmatpush1.msra.mxu0 0.0
        %1042 = vmatprep.subr.mxu0 0.0
        %1043 = vmatpush1.msra.mxu0 0.0
        %1044 = vmatprep.subr.mxu0 0.0
        %1045 = vmatpush1.msra.mxu0 0.0
        %1046 = vmatprep.mubr.f32.mxu0 0.0
        %v1047 = vand.u32 %v749, 4294901760
        %v1048 = vsub.f32 %v749, %v1047
        %v1049 = vand.u32 %v1048, 4294901760
        %1050 = vmatmul.mubr.f32.gmra.mrb[0].mxu0 %v1049
        %v1051 = vpop.f32.mrb[0].mxu0
        %v1052 = vadd.f32 %v978, %v1051
        %v1053 = vpop.f32.mrb[0].mxu0
        %1054 = vdwg.mxu0
        %1055 = vmatprep.subr.mxu0 0.0
        %v1056 = vand.u32 %v753, 4294901760
        %v1057 = vsub.f32 %v753, %v1056
        %v1058 = vand.u32 %v1057, 4294901760
        %1059 = vmatpush1.msra.mxu0 %v1058
        %1060 = vmatprep.subr.mxu0 0.0
        %1061 = vmatpush1.msra.mxu0 0.0
        %1062 = vmatprep.subr.mxu0 0.0
        %1063 = vmatpush1.msra.mxu0 0.0
        %1064 = vmatprep.subr.mxu0 0.0
        %1065 = vmatpush1.msra.mxu0 0.0
        %1066 = vmatprep.subr.mxu0 0.0
        %1067 = vmatpush1.msra.mxu0 0.0
        %1068 = vmatprep.subr.mxu0 0.0
        %1069 = vmatpush1.msra.mxu0 0.0
        %1070 = vmatprep.subr.mxu0 0.0
        %1071 = vmatpush1.msra.mxu0 0.0
        %1072 = vmatprep.subr.mxu0 0.0
        %1073 = vmatpush1.msra.mxu0 0.0
        %1074 = vmatprep.subr.mxu0 0.0
        %1075 = vmatpush1.msra.mxu0 0.0
        %1076 = vmatprep.subr.mxu0 0.0
        %1077 = vmatpush1.msra.mxu0 0.0
        %1078 = vmatprep.subr.mxu0 0.0
        %1079 = vmatpush1.msra.mxu0 0.0
        %1080 = vmatprep.subr.mxu0 0.0
        %1081 = vmatpush1.msra.mxu0 0.0
        %1082 = vmatprep.subr.mxu0 0.0
        %1083 = vmatpush1.msra.mxu0 0.0
        %1084 = vmatprep.subr.mxu0 0.0
        %1085 = vmatpush1.msra.mxu0 0.0
        %1086 = vmatprep.subr.mxu0 0.0
        %1087 = vmatpush1.msra.mxu0 0.0
        %1088 = vmatprep.subr.mxu0 0.0
        %1089 = vmatpush1.msra.mxu0 0.0
        %1090 = vmatprep.subr.mxu0 0.0
        %1091 = vmatpush1.msra.mxu0 0.0
        %1092 = vmatprep.subr.mxu0 0.0
        %1093 = vmatpush1.msra.mxu0 0.0
        %1094 = vmatprep.subr.mxu0 0.0
        %1095 = vmatpush1.msra.mxu0 0.0
        %1096 = vmatprep.subr.mxu0 0.0
        %1097 = vmatpush1.msra.mxu0 0.0
        %1098 = vmatprep.subr.mxu0 0.0
        %1099 = vmatpush1.msra.mxu0 0.0
        %1100 = vmatprep.subr.mxu0 0.0
        %1101 = vmatpush1.msra.mxu0 0.0
        %1102 = vmatprep.subr.mxu0 0.0
        %1103 = vmatpush1.msra.mxu0 0.0
        %1104 = vmatprep.subr.mxu0 0.0
        %1105 = vmatpush1.msra.mxu0 0.0
        %1106 = vmatprep.subr.mxu0 0.0
        %1107 = vmatpush1.msra.mxu0 0.0
        %1108 = vmatprep.subr.mxu0 0.0
        %1109 = vmatpush1.msra.mxu0 0.0
        %1110 = vmatprep.subr.mxu0 0.0
        %1111 = vmatpush1.msra.mxu0 0.0
        %1112 = vmatprep.subr.mxu0 0.0
        %1113 = vmatpush1.msra.mxu0 0.0
        %1114 = vmatprep.subr.mxu0 0.0
        %1115 = vmatpush1.msra.mxu0 0.0
        %1116 = vmatprep.subr.mxu0 0.0
        %1117 = vmatpush1.msra.mxu0 0.0
        %1118 = vmatprep.subr.mxu0 0.0
        %1119 = vmatpush1.msra.mxu0 0.0
        %1120 = vmatprep.subr.mxu0 0.0
        %1121 = vmatpush1.msra.mxu0 0.0
        %1122 = vmatprep.mubr.f32.mxu0 0.0
        %v1123 = vand.u32 %v749, 4294901760
        %1124 = vmatmul.mubr.f32.gmra.mrb[0].mxu0 %v1123
        %v1125 = vpop.f32.mrb[0].mxu0
        %v1126 = vadd.f32 %v1052, %v1125
        %v1127 = vpop.f32.mrb[0].mxu0
        %1128 = vdwg.mxu0
        %1129 = vmatprep.subr.mxu0 0.0
        %v1130 = vand.u32 %v753, 4294901760
        %1131 = vmatpush1.msra.mxu0 %v1130
        %1132 = vmatprep.subr.mxu0 0.0
        %1133 = vmatpush1.msra.mxu0 0.0
        %1134 = vmatprep.subr.mxu0 0.0
        %1135 = vmatpush1.msra.mxu0 0.0
        %1136 = vmatprep.subr.mxu0 0.0
        %1137 = vmatpush1.msra.mxu0 0.0
        %1138 = vmatprep.subr.mxu0 0.0
        %1139 = vmatpush1.msra.mxu0 0.0
        %1140 = vmatprep.subr.mxu0 0.0
        %1141 = vmatpush1.msra.mxu0 0.0
        %1142 = vmatprep.subr.mxu0 0.0
        %1143 = vmatpush1.msra.mxu0 0.0
        %1144 = vmatprep.subr.mxu0 0.0
        %1145 = vmatpush1.msra.mxu0 0.0
        %1146 = vmatprep.subr.mxu0 0.0
        %1147 = vmatpush1.msra.mxu0 0.0
        %1148 = vmatprep.subr.mxu0 0.0
        %1149 = vmatpush1.msra.mxu0 0.0
        %1150 = vmatprep.subr.mxu0 0.0
        %1151 = vmatpush1.msra.mxu0 0.0
        %1152 = vmatprep.subr.mxu0 0.0
        %1153 = vmatpush1.msra.mxu0 0.0
        %1154 = vmatprep.subr.mxu0 0.0
        %1155 = vmatpush1.msra.mxu0 0.0
        %1156 = vmatprep.subr.mxu0 0.0
        %1157 = vmatpush1.msra.mxu0 0.0
        %1158 = vmatprep.subr.mxu0 0.0
        %1159 = vmatpush1.msra.mxu0 0.0
        %1160 = vmatprep.subr.mxu0 0.0
        %1161 = vmatpush1.msra.mxu0 0.0
        %1162 = vmatprep.subr.mxu0 0.0
        %1163 = vmatpush1.msra.mxu0 0.0
        %1164 = vmatprep.subr.mxu0 0.0
        %1165 = vmatpush1.msra.mxu0 0.0
        %1166 = vmatprep.subr.mxu0 0.0
        %1167 = vmatpush1.msra.mxu0 0.0
        %1168 = vmatprep.subr.mxu0 0.0
        %1169 = vmatpush1.msra.mxu0 0.0
        %1170 = vmatprep.subr.mxu0 0.0
        %1171 = vmatpush1.msra.mxu0 0.0
        %1172 = vmatprep.subr.mxu0 0.0
        %1173 = vmatpush1.msra.mxu0 0.0
        %1174 = vmatprep.subr.mxu0 0.0
        %1175 = vmatpush1.msra.mxu0 0.0
        %1176 = vmatprep.subr.mxu0 0.0
        %1177 = vmatpush1.msra.mxu0 0.0
        %1178 = vmatprep.subr.mxu0 0.0
        %1179 = vmatpush1.msra.mxu0 0.0
        %1180 = vmatprep.subr.mxu0 0.0
        %1181 = vmatpush1.msra.mxu0 0.0
        %1182 = vmatprep.subr.mxu0 0.0
        %1183 = vmatpush1.msra.mxu0 0.0
        %1184 = vmatprep.subr.mxu0 0.0
        %1185 = vmatpush1.msra.mxu0 0.0
        %1186 = vmatprep.subr.mxu0 0.0
        %1187 = vmatpush1.msra.mxu0 0.0
        %1188 = vmatprep.subr.mxu0 0.0
        %1189 = vmatpush1.msra.mxu0 0.0
        %1190 = vmatprep.subr.mxu0 0.0
        %1191 = vmatpush1.msra.mxu0 0.0
        %1192 = vmatprep.subr.mxu0 0.0
        %1193 = vmatpush1.msra.mxu0 0.0
        %1194 = vmatprep.mubr.f32.mxu0 0.0
        %v1195 = vand.u32 %v749, 4294901760
        %1196 = vmatmul.mubr.f32.gmra.mrb[0].mxu0 %v1195
        %v1197 = vpop.f32.mrb[0].mxu0
        %v1198 = vadd.f32 %v1126, %v1197
        %v1199 = vpop.f32.mrb[0].mxu0
        %1200 = vdwg.mxu0
        %v1202 = vrot.slane %v1198, 1
        %v1204 = vadd.f32 %v1198, %v1202
        %v1205 = vxor.u32 %v1204, 2147483648
        %v1206 = vmul.f32 %v1205, 1.442695
        %v1207 = vpow.pop %v1206
        %v1208 = vadd.f32 %v1207, 1.0
        %v1209 = vrcp.pop %v1208
        %v1210 = vmul.f32 1.0, %v1209
        %v1211 = vlaneseq
        %v1212 = vshrl.u32 %v1211, 7
        %v1213 = vsub.s32 0, %v1212
        %v1214 = vrot.slane %v1210, %v1213
        %1216 = vbcast.lane.b32.xlu0 %v1214, 256
        %v1217 = vpop.permute.xlu0 %1216
        %s1219 = sor.u32 256, 8
        %1220 = vbcast.lane.b32.xlu0 %v1214, %s1219
        %v1221 = vpop.permute.xlu0 %1220
        %v1222 = vmul.f32 %v231, %v1217
        %v1223 = vmul.f32 %v232, %v1217
        %v1224 = vmul.f32 %v233, %v1221
        %v1225 = vmul.f32 %v234, %v1221
        %v1226 = vadd.f32 %v1222, %v1224
        %v1227 = vrot.slane %v1226, 4
        %v1228 = vadd.f32 %v1226, %v1227
        %v1229 = vrot.slane %v1228, 2
        %v1230 = vadd.f32 %v1228, %v1229
        %v1231 = vrot.slane %v1230, 1
        %v1232 = vadd.f32 %v1230, %v1231
        %v1233 = vadd.f32 %v1223, %v1225
        %v1234 = vrot.slane %v1233, 4
        %v1235 = vadd.f32 %v1233, %v1234
        %v1236 = vrot.slane %v1235, 2
        %v1237 = vadd.f32 %v1235, %v1236
        %v1238 = vrot.slane %v1237, 1
        %v1239 = vadd.f32 %v1237, %v1238
        %v1240 = vrcp.pop 16.0
        %v1241 = vmul.f32 %v1232, %v1240
        %v1242 = vmul.f32 %v1239, %v1240
        %v1243 = vmax.f32 %v1222, %v1224
        %v1244 = vrot.slane %v1243, 4
        %v1245 = vmax.f32 %v1243, %v1244
        %v1246 = vrot.slane %v1245, 2
        %v1247 = vmax.f32 %v1245, %v1246
        %v1248 = vrot.slane %v1247, 1
        %v1249 = vmax.f32 %v1247, %v1248
        %v1250 = vmax.f32 %v1223, %v1225
        %v1251 = vrot.slane %v1250, 4
        %v1252 = vmax.f32 %v1250, %v1251
        %v1253 = vrot.slane %v1252, 2
        %v1254 = vmax.f32 %v1252, %v1253
        %v1255 = vrot.slane %v1254, 1
        %v1256 = vmax.f32 %v1254, %v1255
        %v1257 = vpack.c.bf16 %v1241, %v1241
        %v1258 = vpack.c.bf16 %v1242, %v1242
        %v1259 = vpack.c.bf16 %v1249, %v1249
        %v1260 = vpack.c.bf16 %v1256, %v1256
        %v1261 = vld [vmem:[#allocation5] sm:$0xff]
        %v1262 = vld [vmem:[#allocation5 + $0x8] sm:$0xff]
        %v1263 = vld [vmem:[#allocation5 + $0x10] sm:$0xff]
        %v1264 = vld [vmem:[#allocation5 + $0x18] sm:$0xff]
        %v1265 = vld [vmem:[#allocation5 + $0x20] sm:$0xff]
        %v1266 = vld [vmem:[#allocation5 + $0x28] sm:$0xff]
        %v1267 = vld [vmem:[#allocation5 + $0x30] sm:$0xff]
        %v1268 = vld [vmem:[#allocation5 + $0x38] sm:$0xff]
        %v1269 = vld [vmem:[#allocation5 + $0x40] sm:$0xff]
        %v1270 = vld [vmem:[#allocation5 + $0x48] sm:$0xff]
        %v1271 = vld [vmem:[#allocation5 + $0x50] sm:$0xff]
        %v1272 = vld [vmem:[#allocation5 + $0x58] sm:$0xff]
        %v1273 = vld [vmem:[#allocation5 + $0x60] sm:$0xff]
        %v1274 = vld [vmem:[#allocation5 + $0x68] sm:$0xff]
        %v1275 = vld [vmem:[#allocation5 + $0x70] sm:$0xff]
        %v1276 = vld [vmem:[#allocation5 + $0x78] sm:$0xff]
        %v1277 = vld [vmem:[#allocation5 + $0x80] sm:$0xff]
        %v1278 = vld [vmem:[#allocation5 + $0x88] sm:$0xff]
        %v1279 = vld [vmem:[#allocation5 + $0x90] sm:$0xff]
        %v1280 = vld [vmem:[#allocation5 + $0x98] sm:$0xff]
        %v1281 = vld [vmem:[#allocation5 + $0xa0] sm:$0xff]
        %v1282 = vld [vmem:[#allocation5 + $0xa8] sm:$0xff]
        %v1283 = vld [vmem:[#allocation5 + $0xb0] sm:$0xff]
        %v1284 = vld [vmem:[#allocation5 + $0xb8] sm:$0xff]
        %v1285 = vld [vmem:[#allocation5 + $0xc0] sm:$0xff]
        %v1286 = vld [vmem:[#allocation5 + $0xc8] sm:$0xff]
        %v1287 = vld [vmem:[#allocation5 + $0xd0] sm:$0xff]
        %v1288 = vld [vmem:[#allocation5 + $0xd8] sm:$0xff]
        %v1289 = vld [vmem:[#allocation5 + $0xe0] sm:$0xff]
        %v1290 = vld [vmem:[#allocation5 + $0xe8] sm:$0xff]
        %v1291 = vld [vmem:[#allocation5 + $0xf0] sm:$0xff]
        %v1292 = vld [vmem:[#allocation5 + $0xf8] sm:$0xff]
        %v1293 = vld [vmem:[#allocation5 + $0x100] sm:$0xff]
        %v1294 = vld [vmem:[#allocation5 + $0x108] sm:$0xff]
        %v1295 = vld [vmem:[#allocation5 + $0x110] sm:$0xff]
        %v1296 = vld [vmem:[#allocation5 + $0x118] sm:$0xff]
        %v1297 = vld [vmem:[#allocation5 + $0x120] sm:$0xff]
        %v1298 = vld [vmem:[#allocation5 + $0x128] sm:$0xff]
        %v1299 = vld [vmem:[#allocation5 + $0x130] sm:$0xff]
        %v1300 = vld [vmem:[#allocation5 + $0x138] sm:$0xff]
        %v1301 = vld [vmem:[#allocation5 + $0x140] sm:$0xff]
        %v1302 = vld [vmem:[#allocation5 + $0x148] sm:$0xff]
        %v1303 = vld [vmem:[#allocation5 + $0x150] sm:$0xff]
        %v1304 = vld [vmem:[#allocation5 + $0x158] sm:$0xff]
        %v1305 = vld [vmem:[#allocation5 + $0x160] sm:$0xff]
        %v1306 = vld [vmem:[#allocation5 + $0x168] sm:$0xff]
        %v1307 = vld [vmem:[#allocation5 + $0x170] sm:$0xff]
        %v1308 = vld [vmem:[#allocation5 + $0x178] sm:$0xff]
        %v1309 = vld [vmem:[#allocation5 + $0x180] sm:$0xff]
        %v1310 = vld [vmem:[#allocation5 + $0x188] sm:$0xff]
        %v1311 = vld [vmem:[#allocation5 + $0x190] sm:$0xff]
        %v1312 = vld [vmem:[#allocation5 + $0x198] sm:$0xff]
        %v1313 = vld [vmem:[#allocation5 + $0x1a0] sm:$0xff]
        %v1314 = vld [vmem:[#allocation5 + $0x1a8] sm:$0xff]
        %v1315 = vld [vmem:[#allocation5 + $0x1b0] sm:$0xff]
        %v1316 = vld [vmem:[#allocation5 + $0x1b8] sm:$0xff]
        %v1317 = vld [vmem:[#allocation5 + $0x1c0] sm:$0xff]
        %v1318 = vld [vmem:[#allocation5 + $0x1c8] sm:$0xff]
        %v1319 = vld [vmem:[#allocation5 + $0x1d0] sm:$0xff]
        %v1320 = vld [vmem:[#allocation5 + $0x1d8] sm:$0xff]
        %v1321 = vld [vmem:[#allocation5 + $0x1e0] sm:$0xff]
        %v1322 = vld [vmem:[#allocation5 + $0x1e8] sm:$0xff]
        %v1323 = vld [vmem:[#allocation5 + $0x1f0] sm:$0xff]
        %v1324 = vld [vmem:[#allocation5 + $0x1f8] sm:$0xff]
        %v1389 = vunpack.c.l.b16 %v1261
        %v1390 = vunpack.c.h.b16 %v1261
        %v1391 = vunpack.c.l.b16 %v1262
        %v1392 = vunpack.c.h.b16 %v1262
        %v1393 = vunpack.c.l.b16 %v1263
        %v1394 = vunpack.c.h.b16 %v1263
        %v1395 = vunpack.c.l.b16 %v1264
        %v1396 = vunpack.c.h.b16 %v1264
        %v1397 = vunpack.c.l.b16 %v1265
        %v1398 = vunpack.c.h.b16 %v1265
        %v1399 = vunpack.c.l.b16 %v1266
        %v1400 = vunpack.c.h.b16 %v1266
        %v1401 = vunpack.c.l.b16 %v1267
        %v1402 = vunpack.c.h.b16 %v1267
        %v1403 = vunpack.c.l.b16 %v1268
        %v1404 = vunpack.c.h.b16 %v1268
        %v1405 = vunpack.c.l.b16 %v1269
        %v1406 = vunpack.c.h.b16 %v1269
        %v1407 = vunpack.c.l.b16 %v1270
        %v1408 = vunpack.c.h.b16 %v1270
        %v1409 = vunpack.c.l.b16 %v1271
        %v1410 = vunpack.c.h.b16 %v1271
        %v1411 = vunpack.c.l.b16 %v1272
        %v1412 = vunpack.c.h.b16 %v1272
        %v1413 = vunpack.c.l.b16 %v1273
        %v1414 = vunpack.c.h.b16 %v1273
        %v1415 = vunpack.c.l.b16 %v1274
        %v1416 = vunpack.c.h.b16 %v1274
        %v1417 = vunpack.c.l.b16 %v1275
        %v1418 = vunpack.c.h.b16 %v1275
        %v1419 = vunpack.c.l.b16 %v1276
        %v1420 = vunpack.c.h.b16 %v1276
        %v1421 = vunpack.c.l.b16 %v1277
        %v1422 = vunpack.c.h.b16 %v1277
        %v1423 = vunpack.c.l.b16 %v1278
        %v1424 = vunpack.c.h.b16 %v1278
        %v1425 = vunpack.c.l.b16 %v1279
        %v1426 = vunpack.c.h.b16 %v1279
        %v1427 = vunpack.c.l.b16 %v1280
        %v1428 = vunpack.c.h.b16 %v1280
        %v1429 = vunpack.c.l.b16 %v1281
        %v1430 = vunpack.c.h.b16 %v1281
        %v1431 = vunpack.c.l.b16 %v1282
        %v1432 = vunpack.c.h.b16 %v1282
        %v1433 = vunpack.c.l.b16 %v1283
        %v1434 = vunpack.c.h.b16 %v1283
        %v1435 = vunpack.c.l.b16 %v1284
        %v1436 = vunpack.c.h.b16 %v1284
        %v1437 = vunpack.c.l.b16 %v1285
        %v1438 = vunpack.c.h.b16 %v1285
        %v1439 = vunpack.c.l.b16 %v1286
        %v1440 = vunpack.c.h.b16 %v1286
        %v1441 = vunpack.c.l.b16 %v1287
        %v1442 = vunpack.c.h.b16 %v1287
        %v1443 = vunpack.c.l.b16 %v1288
        %v1444 = vunpack.c.h.b16 %v1288
        %v1445 = vunpack.c.l.b16 %v1289
        %v1446 = vunpack.c.h.b16 %v1289
        %v1447 = vunpack.c.l.b16 %v1290
        %v1448 = vunpack.c.h.b16 %v1290
        %v1449 = vunpack.c.l.b16 %v1291
        %v1450 = vunpack.c.h.b16 %v1291
        %v1451 = vunpack.c.l.b16 %v1292
        %v1452 = vunpack.c.h.b16 %v1292
        %v1453 = vunpack.c.l.b16 %v1293
        %v1454 = vunpack.c.h.b16 %v1293
        %v1455 = vunpack.c.l.b16 %v1294
        %v1456 = vunpack.c.h.b16 %v1294
        %v1457 = vunpack.c.l.b16 %v1295
        %v1458 = vunpack.c.h.b16 %v1295
        %v1459 = vunpack.c.l.b16 %v1296
        %v1460 = vunpack.c.h.b16 %v1296
        %v1461 = vunpack.c.l.b16 %v1297
        %v1462 = vunpack.c.h.b16 %v1297
        %v1463 = vunpack.c.l.b16 %v1298
        %v1464 = vunpack.c.h.b16 %v1298
        %v1465 = vunpack.c.l.b16 %v1299
        %v1466 = vunpack.c.h.b16 %v1299
        %v1467 = vunpack.c.l.b16 %v1300
        %v1468 = vunpack.c.h.b16 %v1300
        %v1469 = vunpack.c.l.b16 %v1301
        %v1470 = vunpack.c.h.b16 %v1301
        %v1471 = vunpack.c.l.b16 %v1302
        %v1472 = vunpack.c.h.b16 %v1302
        %v1473 = vunpack.c.l.b16 %v1303
        %v1474 = vunpack.c.h.b16 %v1303
        %v1475 = vunpack.c.l.b16 %v1304
        %v1476 = vunpack.c.h.b16 %v1304
        %v1477 = vunpack.c.l.b16 %v1305
        %v1478 = vunpack.c.h.b16 %v1305
        %v1479 = vunpack.c.l.b16 %v1306
        %v1480 = vunpack.c.h.b16 %v1306
        %v1481 = vunpack.c.l.b16 %v1307
        %v1482 = vunpack.c.h.b16 %v1307
        %v1483 = vunpack.c.l.b16 %v1308
        %v1484 = vunpack.c.h.b16 %v1308
        %v1485 = vunpack.c.l.b16 %v1309
        %v1486 = vunpack.c.h.b16 %v1309
        %v1487 = vunpack.c.l.b16 %v1310
        %v1488 = vunpack.c.h.b16 %v1310
        %v1489 = vunpack.c.l.b16 %v1311
        %v1490 = vunpack.c.h.b16 %v1311
        %v1491 = vunpack.c.l.b16 %v1312
        %v1492 = vunpack.c.h.b16 %v1312
        %v1493 = vunpack.c.l.b16 %v1313
        %v1494 = vunpack.c.h.b16 %v1313
        %v1495 = vunpack.c.l.b16 %v1314
        %v1496 = vunpack.c.h.b16 %v1314
        %v1497 = vunpack.c.l.b16 %v1315
        %v1498 = vunpack.c.h.b16 %v1315
        %v1499 = vunpack.c.l.b16 %v1316
        %v1500 = vunpack.c.h.b16 %v1316
        %v1501 = vunpack.c.l.b16 %v1317
        %v1502 = vunpack.c.h.b16 %v1317
        %v1503 = vunpack.c.l.b16 %v1318
        %v1504 = vunpack.c.h.b16 %v1318
        %v1505 = vunpack.c.l.b16 %v1319
        %v1506 = vunpack.c.h.b16 %v1319
        %v1507 = vunpack.c.l.b16 %v1320
        %v1508 = vunpack.c.h.b16 %v1320
        %v1509 = vunpack.c.l.b16 %v1321
        %v1510 = vunpack.c.h.b16 %v1321
        %v1511 = vunpack.c.l.b16 %v1322
        %v1512 = vunpack.c.h.b16 %v1322
        %v1513 = vunpack.c.l.b16 %v1323
        %v1514 = vunpack.c.h.b16 %v1323
        %v1515 = vunpack.c.l.b16 %v1324
        %v1516 = vunpack.c.h.b16 %v1324
        %v1517 = vpack.c.b16 %v1391, %v1389
        %v1518 = vpack.c.b16 %v1392, %v1390
        %v1519 = vpack.c.b16 %v1395, %v1393
        %v1520 = vpack.c.b16 %v1396, %v1394
        %v1521 = vpack.c.b16 %v1399, %v1397
        %v1522 = vpack.c.b16 %v1400, %v1398
        %v1523 = vpack.c.b16 %v1403, %v1401
        %v1524 = vpack.c.b16 %v1404, %v1402
        %v1525 = vpack.c.b16 %v1407, %v1405
        %v1526 = vpack.c.b16 %v1408, %v1406
        %v1527 = vpack.c.b16 %v1411, %v1409
        %v1528 = vpack.c.b16 %v1412, %v1410
        %v1529 = vpack.c.b16 %v1415, %v1413
        %v1530 = vpack.c.b16 %v1416, %v1414
        %v1531 = vpack.c.b16 %v1419, %v1417
        %v1532 = vpack.c.b16 %v1420, %v1418
        %v1533 = vpack.c.b16 %v1423, %v1421
        %v1534 = vpack.c.b16 %v1424, %v1422
        %v1535 = vpack.c.b16 %v1427, %v1425
        %v1536 = vpack.c.b16 %v1428, %v1426
        %v1537 = vpack.c.b16 %v1431, %v1429
        %v1538 = vpack.c.b16 %v1432, %v1430
        %v1539 = vpack.c.b16 %v1435, %v1433
        %v1540 = vpack.c.b16 %v1436, %v1434
        %v1541 = vpack.c.b16 %v1439, %v1437
        %v1542 = vpack.c.b16 %v1440, %v1438
        %v1543 = vpack.c.b16 %v1443, %v1441
        %v1544 = vpack.c.b16 %v1444, %v1442
        %v1545 = vpack.c.b16 %v1447, %v1445
        %v1546 = vpack.c.b16 %v1448, %v1446
        %v1547 = vpack.c.b16 %v1451, %v1449
        %v1548 = vpack.c.b16 %v1452, %v1450
        %v1549 = vpack.c.b16 %v1455, %v1453
        %v1550 = vpack.c.b16 %v1456, %v1454
        %v1551 = vpack.c.b16 %v1459, %v1457
        %v1552 = vpack.c.b16 %v1460, %v1458
        %v1553 = vpack.c.b16 %v1463, %v1461
        %v1554 = vpack.c.b16 %v1464, %v1462
        %v1555 = vpack.c.b16 %v1467, %v1465
        %v1556 = vpack.c.b16 %v1468, %v1466
        %v1557 = vpack.c.b16 %v1471, %v1469
        %v1558 = vpack.c.b16 %v1472, %v1470
        %v1559 = vpack.c.b16 %v1475, %v1473
        %v1560 = vpack.c.b16 %v1476, %v1474
        %v1561 = vpack.c.b16 %v1479, %v1477
        %v1562 = vpack.c.b16 %v1480, %v1478
        %v1563 = vpack.c.b16 %v1483, %v1481
        %v1564 = vpack.c.b16 %v1484, %v1482
        %v1565 = vpack.c.b16 %v1487, %v1485
        %v1566 = vpack.c.b16 %v1488, %v1486
        %v1567 = vpack.c.b16 %v1491, %v1489
        %v1568 = vpack.c.b16 %v1492, %v1490
        %v1569 = vpack.c.b16 %v1495, %v1493
        %v1570 = vpack.c.b16 %v1496, %v1494
        %v1571 = vpack.c.b16 %v1499, %v1497
        %v1572 = vpack.c.b16 %v1500, %v1498
        %v1573 = vpack.c.b16 %v1503, %v1501
        %v1574 = vpack.c.b16 %v1504, %v1502
        %v1575 = vpack.c.b16 %v1507, %v1505
        %v1576 = vpack.c.b16 %v1508, %v1506
        %v1577 = vpack.c.b16 %v1511, %v1509
        %v1578 = vpack.c.b16 %v1512, %v1510
        %v1579 = vpack.c.b16 %v1515, %v1513
        %v1580 = vpack.c.b16 %v1516, %v1514
        %1645 = vmatprep.subr.bf16.mxu0 %v1518
        %1646 = vmatpush1.bf16.msra.mxu0 %v1517
        %1647 = vmatprep.subr.bf16.mxu0 %v1520
        %1648 = vmatpush1.bf16.msra.mxu0 %v1519
        %1649 = vmatprep.subr.bf16.mxu0 %v1522
        %1650 = vmatpush1.bf16.msra.mxu0 %v1521
        %1651 = vmatprep.subr.bf16.mxu0 %v1524
        %1652 = vmatpush1.bf16.msra.mxu0 %v1523
        %1653 = vmatprep.subr.bf16.mxu0 %v1526
        %1654 = vmatpush1.bf16.msra.mxu0 %v1525
        %1655 = vmatprep.subr.bf16.mxu0 %v1528
        %1656 = vmatpush1.bf16.msra.mxu0 %v1527
        %1657 = vmatprep.subr.bf16.mxu0 %v1530
        %1658 = vmatpush1.bf16.msra.mxu0 %v1529
        %1659 = vmatprep.subr.bf16.mxu0 %v1532
        %1660 = vmatpush1.bf16.msra.mxu0 %v1531
        %1661 = vmatprep.subr.bf16.mxu0 %v1534
        %1662 = vmatpush1.bf16.msra.mxu0 %v1533
        %1663 = vmatprep.subr.bf16.mxu0 %v1536
        %1664 = vmatpush1.bf16.msra.mxu0 %v1535
        %1665 = vmatprep.subr.bf16.mxu0 %v1538
        %1666 = vmatpush1.bf16.msra.mxu0 %v1537
        %1667 = vmatprep.subr.bf16.mxu0 %v1540
        %1668 = vmatpush1.bf16.msra.mxu0 %v1539
        %1669 = vmatprep.subr.bf16.mxu0 %v1542
        %1670 = vmatpush1.bf16.msra.mxu0 %v1541
        %1671 = vmatprep.subr.bf16.mxu0 %v1544
        %1672 = vmatpush1.bf16.msra.mxu0 %v1543
        %1673 = vmatprep.subr.bf16.mxu0 %v1546
        %1674 = vmatpush1.bf16.msra.mxu0 %v1545
        %1675 = vmatprep.subr.bf16.mxu0 %v1548
        %1676 = vmatpush1.bf16.msra.mxu0 %v1547
        %1677 = vmatprep.mubr.bf16.mxu0 %v1258
        %1678 = vmatmul.mubr.bf16.gmra.mrb[0].mxu0 %v1257
        %v1679 = vpop.f32.mrb[0].mxu0
        %v1680 = vadd.f32 0.0, %v1679
        %v1681 = vpop.f32.mrb[0].mxu0
        %v1682 = vadd.f32 0.0, %v1681
        %v1683 = vpop.f32.mrb[0].mxu0
        %v1684 = vpop.f32.mrb[0].mxu0
        %1685 = vdwg.mxu0
        %1686 = vmatprep.subr.bf16.mxu0 %v1550
        %1687 = vmatpush1.bf16.msra.mxu0 %v1549
        %1688 = vmatprep.subr.bf16.mxu0 %v1552
        %1689 = vmatpush1.bf16.msra.mxu0 %v1551
        %1690 = vmatprep.subr.bf16.mxu0 %v1554
        %1691 = vmatpush1.bf16.msra.mxu0 %v1553
        %1692 = vmatprep.subr.bf16.mxu0 %v1556
        %1693 = vmatpush1.bf16.msra.mxu0 %v1555
        %1694 = vmatprep.subr.bf16.mxu0 %v1558
        %1695 = vmatpush1.bf16.msra.mxu0 %v1557
        %1696 = vmatprep.subr.bf16.mxu0 %v1560
        %1697 = vmatpush1.bf16.msra.mxu0 %v1559
        %1698 = vmatprep.subr.bf16.mxu0 %v1562
        %1699 = vmatpush1.bf16.msra.mxu0 %v1561
        %1700 = vmatprep.subr.bf16.mxu0 %v1564
        %1701 = vmatpush1.bf16.msra.mxu0 %v1563
        %1702 = vmatprep.subr.bf16.mxu0 %v1566
        %1703 = vmatpush1.bf16.msra.mxu0 %v1565
        %1704 = vmatprep.subr.bf16.mxu0 %v1568
        %1705 = vmatpush1.bf16.msra.mxu0 %v1567
        %1706 = vmatprep.subr.bf16.mxu0 %v1570
        %1707 = vmatpush1.bf16.msra.mxu0 %v1569
        %1708 = vmatprep.subr.bf16.mxu0 %v1572
        %1709 = vmatpush1.bf16.msra.mxu0 %v1571
        %1710 = vmatprep.subr.bf16.mxu0 %v1574
        %1711 = vmatpush1.bf16.msra.mxu0 %v1573
        %1712 = vmatprep.subr.bf16.mxu0 %v1576
        %1713 = vmatpush1.bf16.msra.mxu0 %v1575
        %1714 = vmatprep.subr.bf16.mxu0 %v1578
        %1715 = vmatpush1.bf16.msra.mxu0 %v1577
        %1716 = vmatprep.subr.bf16.mxu0 %v1580
        %1717 = vmatpush1.bf16.msra.mxu0 %v1579
        %1718 = vmatprep.mubr.bf16.mxu0 %v1260
        %1719 = vmatmul.mubr.bf16.gmra.mrb[0].mxu0 %v1259
        %v1720 = vpop.f32.mrb[0].mxu0
        %v1721 = vadd.f32 %v1680, %v1720
        %v1722 = vpop.f32.mrb[0].mxu0
        %v1723 = vadd.f32 %v1682, %v1722
        %v1724 = vpop.f32.mrb[0].mxu0
        %v1725 = vpop.f32.mrb[0].mxu0
        %1726 = vdwg.mxu0
        %v1727 = vxor.u32 %v1721, 2147483648
        %v1728 = vxor.u32 %v1723, 2147483648
        %v1729 = vmul.f32 %v1727, 1.442695
        %v1730 = vpow.pop %v1729
        %v1731 = vmul.f32 %v1728, 1.442695
        %v1732 = vpow.pop %v1731
        %v1733 = vadd.f32 %v1730, 1.0
        %v1734 = vadd.f32 %v1732, 1.0
        %v1735 = vrcp.pop %v1733
        %v1736 = vmul.f32 1.0, %v1735
        %v1737 = vrcp.pop %v1734
        %v1738 = vmul.f32 1.0, %v1737
        %v1739 = vlaneseq
        %v1740 = vshrl.u32 %v1739, 7
        %v1741 = vsub.s32 0, %v1740
        %v1742 = vrot.slane %v1736, %v1741
        %v1743 = vlaneseq
        %v1744 = vshrl.u32 %v1743, 7
        %v1745 = vsub.s32 0, %v1744
        %v1746 = vrot.slane %v1738, %v1745
        %v1747 = vmul.f32 %v1222, %v1742
        %v1748 = vmul.f32 %v1223, %v1746
        %v1749 = vmul.f32 %v1224, %v1742
        %v1750 = vmul.f32 %v1225, %v1746
        %1751 = vst [vmem:[%s230] sm:$0xff] %v1747
        %1752 = vst [vmem:[%s230 + $0x8] sm:$0xff] %v1748
        %1753 = vst [vmem:[%s230 + $0x10] sm:$0xff] %v1749
        %1754 = vst [vmem:[%s230 + $0x18] sm:$0xff] %v1750
        %s1755 = sand.u32 %s119, 1
        %s1756 = scalar_lea.sflag [#allocation4], %s1755
        %s1757 = sand.u32 %s119, 1
        %s1758 = smul.addr %s1757, 32
        %s1759 = scalar_lea.vmem [#allocation7], %s1758
        // Predicated region
        $region45: #{tpu_custom_call.1} parent=35 // pred_check
          %p1760 = pneg %p129
        $region46: #{tpu_custom_call.1} parent=35 // pred_check_branch
          %1762 = sbr.rel (%p1760) target = $region48
        $region47: #{tpu_custom_call.1} parent=35 // pred_region
          %s1764 = ssub.s32 512, 512
          %1765 = vsyncadd %s1756, %s1764
          %s1766 = smul.addr %s22, 4
          %s1767 = smul.addr %s1766, 128
          %s1768 = scalar_lea.hbm %s4, %s1767
          %s1769 = sshll.u32 %s1759, 4
          %s1770 = int_to_ptr.vmem [resolvable:$true] %s1769
          %1775 = dma.vmem_to_hbm [thread:$0]  %s1770, 512, %s1768, %s1756, 256, 256, 16
        $region48: #{tpu_custom_call.1} parent=35 // pred_fallthru
          _
      $region36: #{tpu_custom_call.1} parent=5 // pred_fallthru
        _
      %p1776 = scmp.le.s32.totalorder 2, %s17
      // Predicated region
      $region49: #{tpu_custom_call.1} parent=5 // pred_check
        %p1777 = pneg %p1776
      $region50: #{tpu_custom_call.1} parent=5 // pred_check_branch
        %1779 = sbr.rel (%p1777) target = $region52
      $region51: #{tpu_custom_call.1} parent=5 // pred_region
        %s1780 = ssub.s32 %s17, 2
        // Predicated region
        $region53: #{tpu_custom_call.1} parent=51 // pred_check
          %p1781 = pneg %p135
        $region54: #{tpu_custom_call.1} parent=51 // pred_check_branch
          %1783 = sbr.rel (%p1781) target = $region56
        $region55: #{tpu_custom_call.1} parent=51 // pred_region
          %s1784 = sand.u32 %s120, 1
          %s1785 = scalar_lea.sflag [#allocation4], %s1784
          %s1786 = sand.u32 %s120, 1
          %s1787 = smul.addr %s1786, 32
          %s1788 = scalar_lea.vmem [#allocation7], %s1787
          %1789 = dma.done %s1785, 512
        $region56: #{tpu_custom_call.1} parent=51 // pred_fallthru
          _
      $region52: #{tpu_custom_call.1} parent=5 // pred_fallthru
        _
    $region6: #{tpu_custom_call.1} parent=1 // loop_footer
      %s21 = sadd.s32 1, %s17
    $region7: #{tpu_custom_call.1} parent=1 // loop_footer_branch
      %16 = sbr.rel target = $region3
    $region8: #{tpu_custom_call.1} parent=1 // loop_exit
      _
    %1790 = vsyncpa [#allocation3], 1
    %s1791 = scalar_lea.sflag [#allocation3], 1
    %1792 = vsyncpa %s1791, 1
    %1793 = vsyncpa [#allocation6], 1
    %1794 = vsyncpa [#allocation4], 1
    %s1795 = scalar_lea.sflag [#allocation4], 1
    %1796 = vsyncpa %s1795, 1

</llo_original>
